<compile_context>
chip_gen: v7x
topology: tpu7x:2x2x1
jax: 0.10.0
libtpu: 0.0.40
codegen_flags: <defaults>
</compile_context>

<pallas_src>
import functools
import math

import jax
import jax.numpy as jnp
from jax.experimental import pallas as pl
from jax.experimental.pallas import tpu as pltpu

# ---- config (stand-in for the missing `Config`) ----
B = 2
H_SP, W_SP = 4, 4
S = H_SP * W_SP             # seq = H * W = 16
D_MODEL = 32
N_HEADS = 4
HIDDEN = 64
DIM_K = D_MODEL // N_HEADS  # 8
DIM_V = DIM_K               # 8
DK_H = DIM_K // N_HEADS     # 2  (per-head dim after the module's reshape)
DV_H = DIM_V // N_HEADS     # 2
EPS = 1e-5                  # nn.LayerNorm default
NORM_FACT = 1.0 / math.sqrt(D_MODEL)

_VMEM = pltpu.MemorySpace.VMEM


def _vmem_specs(n):
    return [pl.BlockSpec(memory_space=_VMEM) for _ in range(n)]


# ------------- kernel 1: fused Q / [K|V] projections (one launch) -------------

def _qkv_proj_kernel(x_ref, f_ref, wq_ref, bq_ref, wkv_ref, bkv_ref, q_ref, kv_ref):
    # Q = x @ Wq + bq ; [K|V] = f @ [Wk|Wv] + [bk|bv]  (K/V weights concatenated
    # so the two projections of f become a single, lane-denser matmul).
    q_ref[...] = (jnp.dot(x_ref[...], wq_ref[...],
                          preferred_element_type=jnp.float32) + bq_ref[...])
    kv_ref[...] = (jnp.dot(f_ref[...], wkv_ref[...],
                           preferred_element_type=jnp.float32) + bkv_ref[...])


def qkv_proj(x2, f2, wq, bq, wkv, bkv):
    M = x2.shape[0]
    return pl.pallas_call(
        _qkv_proj_kernel,
        out_shape=(jax.ShapeDtypeStruct((M, wq.shape[1]), jnp.float32),
                   jax.ShapeDtypeStruct((M, wkv.shape[1]), jnp.float32)),
        in_specs=_vmem_specs(6),
        out_specs=(pl.BlockSpec(memory_space=_VMEM),
                   pl.BlockSpec(memory_space=_VMEM)),
    )(x2, f2, wq, bq.reshape(1, -1), wkv, bkv.reshape(1, -1))


# ------------- kernel 2: masked attention, all (head, batch) groups at once ----

def _attention_kernel(q_ref, k_ref, v_ref, o_ref, *, norm_fact):
    q = q_ref[...]   # (G, S, dk_h)
    k = k_ref[...]   # (G, S, dk_h)
    v = v_ref[...]   # (G, S, dv_h)
    # scores = Q @ K^T * norm_fact for every group in one batched contraction
    # (scale applied after the matmul, matching the PyTorch op order exactly).
    s = jnp.einsum('gsd,gtd->gst', q, k,
                   preferred_element_type=jnp.float32) * norm_fact
    # mean-threshold mask: entries with (score - row_mean) <= 0 get -inf BEFORE
    # softmax (same comparison and ordering as the PyTorch module).
    thre = jnp.mean(s, axis=-1, keepdims=True)
    s = jnp.where(s - thre > 0, s, jnp.float32(-jnp.inf))
    # softmax over last dim (max-subtracted, matches F.softmax numerics)
    m = jnp.max(s, axis=-1, keepdims=True)
    p = jnp.exp(s - m)
    denom = jnp.sum(p, axis=-1, keepdims=True)
    attn = p * pl.reciprocal(denom, approx=True)   # EUP reciprocal: free slot
    o_ref[...] = jnp.einsum('gst,gtd->gsd', attn, v,
                            preferred_element_type=jnp.float32)


def masked_attention(qh, kh, vh):
    G, Sv, _ = qh.shape
    dv = vh.shape[-1]
    return pl.pallas_call(
        functools.partial(_attention_kernel, norm_fact=NORM_FACT),
        out_shape=jax.ShapeDtypeStruct((G, Sv, dv), jnp.float32),
        in_specs=_vmem_specs(3),
        out_specs=pl.BlockSpec(memory_space=_VMEM),
    )(qh, kh, vh)


# ------------- kernel 3: out-proj + Add_Norm1 + FeedForward + Add_Norm2 + residual

def _layer_norm(x, gamma, beta):
    mu = jnp.mean(x, axis=-1, keepdims=True)
    var = jnp.mean(jnp.square(x - mu), axis=-1, keepdims=True)
    return (x - mu) * jax.lax.rsqrt(var + EPS) * gamma + beta


def _tail_kernel(attn_ref, x_ref, wo_ref, bo_ref, g_ref, b_ref,
                 w1_ref, b1_ref, w2_ref, b2_ref, o_ref):
    x = x_ref[...]
    gamma = g_ref[...]        # loaded once, reused by both LayerNorms
    beta = b_ref[...]
    # multi-head output projection
    mha = (jnp.dot(attn_ref[...], wo_ref[...],
                   preferred_element_type=jnp.float32) + bo_ref[...])
    # Add_Norm #1 (dropout = identity in eval mode)
    h1 = _layer_norm(x + mha, gamma, beta)
    # Feed_Forward1: Linear -> ReLU -> Linear
    ff = jnp.maximum(
        jnp.dot(h1, w1_ref[...], preferred_element_type=jnp.float32) + b1_ref[...],
        0.0)
    ff = jnp.dot(ff, w2_ref[...], preferred_element_type=jnp.float32) + b2_ref[...]
    # Add_Norm #2 (same Add_Norm instance -> same LayerNorm params)
    h2 = _layer_norm(h1 + ff, gamma, beta)
    # Decoder residual: output + q
    o_ref[...] = h2 + x


def decoder_tail(attn2, x2, params):
    M, D = x2.shape
    wo, bo = params["o"]
    w1, b1 = params["l1"]
    w2, b2 = params["l2"]
    return pl.pallas_call(
        _tail_kernel,
        out_shape=jax.ShapeDtypeStruct((M, D), jnp.float32),
        in_specs=_vmem_specs(10),
        out_specs=pl.BlockSpec(memory_space=_VMEM),
    )(attn2, x2, wo, bo.reshape(1, -1),
      params["ln_g"].reshape(1, -1), params["ln_b"].reshape(1, -1),
      w1, b1.reshape(1, -1), w2, b2.reshape(1, -1))


# ------------- parameters (deterministic, PyTorch-default-like init) -------------

def init_params(key):
    ks = jax.random.split(key, 6)

    def lin(k, din, dout):
        kw, kb = jax.random.split(k)
        bound = 1.0 / math.sqrt(din)
        w = jax.random.uniform(kw, (din, dout), jnp.float32, -bound, bound)
        b = jax.random.uniform(kb, (dout,), jnp.float32, -bound, bound)
        return w, b

    wq, bq = lin(ks[0], D_MODEL, DIM_K)
    wk, bk = lin(ks[1], D_MODEL, DIM_K)
    wv, bv = lin(ks[2], D_MODEL, DIM_V)
    return {
        "q": (wq, bq),
        # K and V projection weights concatenated -> one matmul in kernel 1
        "kv": (jnp.concatenate([wk, wv], axis=1),
               jnp.concatenate([bk, bv], axis=0)),
        "o": lin(ks[3], DIM_V, D_MODEL),
        "l1": lin(ks[4], D_MODEL, HIDDEN),
        "l2": lin(ks[5], HIDDEN, D_MODEL),
        # nn.LayerNorm default init: weight=1, bias=0 (Decoder reuses one Add_Norm)
        "ln_g": jnp.ones((D_MODEL,), jnp.float32),
        "ln_b": jnp.zeros((D_MODEL,), jnp.float32),
    }


# ------------- forward (tiny XLA glue, compute in 3 fused Pallas kernels) -------------

def cross_modal_forward(params, target, f1):
    Bv, Sv, Dv = target.shape
    x2 = target.reshape(Bv * Sv, Dv)      # (B*S, d_model)
    f2 = f1.reshape(Bv * Sv, Dv)

    # --- Mutihead_Attention projections (1 fused kernel) ---
    wq, bq = params["q"]
    wkv, bkv = params["kv"]
    q, kv = qkv_proj(x2, f2, wq, bq, wkv, bkv)        # (B*S, 8), (B*S, 16)

    # glue: torch's row-major reshape (B,S,dim_k) -> (n_heads,B,S,dk_h); flattening
    # the leading (head,batch) pair is exactly reshape(n_heads*B, S, dk_h) on the
    # same flat buffer. Kept as XLA glue on <=1 KB contiguous tensors (metadata-
    # level reshape); a lane-changing reshape is not reliably lowerable in Mosaic.
    qh = q.reshape(N_HEADS * Bv, Sv, DK_H)
    kh = kv[:, :DIM_K].reshape(N_HEADS * Bv, Sv, DK_H)
    vh = kv[:, DIM_K:].reshape(N_HEADS * Bv, Sv, DV_H)

    # --- masked attention over all (head, batch) groups (1 kernel, 1 step) ---
    attn_h = masked_attention(qh, kh, vh)             # (n_heads*B, S, dv_h)
    # torch: .reshape(B, S, -1) on the (n_heads,B,S,dv_h) tensor (row-major)
    attn2 = attn_h.reshape(Bv * Sv, DIM_V)            # (B*S, dim_v)

    # --- output proj + Add_Norm1 + FF + Add_Norm2 + residual (1 fused kernel) ---
    out2 = decoder_tail(attn2, x2, params)
    return out2.reshape(Bv, Sv, Dv)


# ------------- pure-JAX reference (mirrors the PyTorch module, eval mode) -------------

def cross_modal_reference(params, target, f1):
    hp = jax.lax.Precision.HIGHEST
    wq, bq = params["q"]
    wkv, bkv = params["kv"]
    wk, bk = wkv[:, :DIM_K], bkv[:DIM_K]
    wv, bv = wkv[:, DIM_K:], bkv[DIM_K:]
    wo, bo = params["o"]
    w1, b1 = params["l1"]
    w2, b2 = params["l2"]
    g, b = params["ln_g"], params["ln_b"]

    def layer_norm(x):
        mu = jnp.mean(x, axis=-1, keepdims=True)
        var = jnp.mean(jnp.square(x - mu), axis=-1, keepdims=True)
        return (x - mu) / jnp.sqrt(var + EPS) * g + b

    def mha(x, y):
        Bv, Sv, _ = x.shape
        Q = (jnp.dot(x.reshape(-1, D_MODEL), wq, precision=hp) + bq
             ).reshape(N_HEADS, Bv, Sv, DK_H)
        K = (jnp.dot(y.reshape(-1, D_MODEL), wk, precision=hp) + bk
             ).reshape(N_HEADS, Bv, Sv, DK_H)
        V = (jnp.dot(y.reshape(-1, D_MODEL), wv, precision=hp) + bv
             ).reshape(N_HEADS, Bv, Sv, DV_H)
        s = jnp.einsum('hbsd,hbtd->hbst', Q, K, precision=hp) * NORM_FACT
        thre = jnp.mean(s, axis=-1, keepdims=True)
        s = jnp.where(s - thre > 0, s, -jnp.inf)
        p = jax.nn.softmax(s, axis=-1)
        o = jnp.einsum('hbst,hbtd->hbsd', p, V, precision=hp).reshape(Bv, Sv, DIM_V)
        return jnp.dot(o, wo, precision=hp) + bo

    h1 = layer_norm(target + mha(target, f1))
    ff = jnp.dot(jnp.maximum(jnp.dot(h1, w1, precision=hp) + b1, 0.0),
                 w2, precision=hp) + b2
    h2 = layer_norm(h1 + ff)
    return h2 + target


if __name__ == "__main__":
    key = jax.random.PRNGKey(0)
    kp, kt, kf = jax.random.split(key, 3)
    params = init_params(kp)
    target = jax.random.normal(kt, (B, S, D_MODEL), dtype=jnp.float32)
    f1 = jax.random.normal(kf, (B, S, D_MODEL), dtype=jnp.float32)

    fwd = jax.jit(functools.partial(cross_modal_forward, params))
    out = jax.block_until_ready(fwd(target, f1))

    ref = cross_modal_reference(params, target, f1)
    assert out.shape == (B, S, D_MODEL)
    assert bool(jnp.all(jnp.isfinite(out)))
    max_err = float(jnp.max(jnp.abs(out - ref)))
    assert bool(jnp.allclose(out, ref, atol=2e-2, rtol=2e-2)), max_err
    print("KERNEL_OK")
</pallas_src>

<mosaic_0001>
module attributes {stable_mosaic.version = 11 : i64} {
  func.func @_qkv_proj_kernel(%arg0: memref<32x32xf32, #tpu.memory_space<vmem>>, %arg1: memref<32x32xf32, #tpu.memory_space<vmem>>, %arg2: memref<32x8xf32, #tpu.memory_space<vmem>>, %arg3: memref<1x8xf32, #tpu.memory_space<vmem>>, %arg4: memref<32x16xf32, #tpu.memory_space<vmem>>, %arg5: memref<1x16xf32, #tpu.memory_space<vmem>>, %arg6: memref<32x8xf32, #tpu.memory_space<vmem>>, %arg7: memref<32x16xf32, #tpu.memory_space<vmem>>) attributes {dimension_semantics = [], scalar_prefetch = 0 : i64, scratch_operands = 0 : i64, tpu.core_type = #tpu.core_type<tc>} {
    %c0 = arith.constant 0 : index
    %c0_0 = arith.constant 0 : index
    %0 = vector.load %arg0[%c0, %c0_0] : memref<32x32xf32, #tpu.memory_space<vmem>>, vector<32x32xf32>
    %c0_1 = arith.constant 0 : index
    %c0_2 = arith.constant 0 : index
    %1 = vector.load %arg2[%c0_1, %c0_2] : memref<32x8xf32, #tpu.memory_space<vmem>>, vector<32x8xf32>
    %cst = arith.constant dense<0.000000e+00> : vector<32x8xf32>
    %2 = tpu.matmul %0, %1, %cst {dimension_numbers = #tpu.dot_dimension_numbers<[1], [0], [0], [1], [0, 0, 1, 1], [], []>} : vector<32x32xf32>, vector<32x8xf32>, vector<32x8xf32> -> vector<32x8xf32>
    %c0_3 = arith.constant 0 : index
    %c0_4 = arith.constant 0 : index
    %3 = vector.load %arg3[%c0_3, %c0_4] : memref<1x8xf32, #tpu.memory_space<vmem>>, vector<1x8xf32>
    %4 = vector.broadcast %3 : vector<1x8xf32> to vector<32x8xf32>
    %5 = arith.addf %2, %4 : vector<32x8xf32>
    %c0_5 = arith.constant 0 : index
    %c0_6 = arith.constant 0 : index
    %6 = vector.load %arg6[%c0_5, %c0_6] : memref<32x8xf32, #tpu.memory_space<vmem>>, vector<32x8xf32>
    tpu.vector_store %arg6[%c0_5, %c0_6], %5 {strides = array<i32>} : memref<32x8xf32, #tpu.memory_space<vmem>>, vector<32x8xf32>,
    %c0_7 = arith.constant 0 : index
    %c0_8 = arith.constant 0 : index
    %7 = vector.load %arg1[%c0_7, %c0_8] : memref<32x32xf32, #tpu.memory_space<vmem>>, vector<32x32xf32>
    %c0_9 = arith.constant 0 : index
    %c0_10 = arith.constant 0 : index
    %8 = vector.load %arg4[%c0_9, %c0_10] : memref<32x16xf32, #tpu.memory_space<vmem>>, vector<32x16xf32>
    %cst_11 = arith.constant dense<0.000000e+00> : vector<32x16xf32>
    %9 = tpu.matmul %7, %8, %cst_11 {dimension_numbers = #tpu.dot_dimension_numbers<[1], [0], [0], [1], [0, 0, 1, 1], [], []>} : vector<32x32xf32>, vector<32x16xf32>, vector<32x16xf32> -> vector<32x16xf32>
    %c0_12 = arith.constant 0 : index
    %c0_13 = arith.constant 0 : index
    %10 = vector.load %arg5[%c0_12, %c0_13] : memref<1x16xf32, #tpu.memory_space<vmem>>, vector<1x16xf32>
    %11 = vector.broadcast %10 : vector<1x16xf32> to vector<32x16xf32>
    %12 = arith.addf %9, %11 : vector<32x16xf32>
    %c0_14 = arith.constant 0 : index
    %c0_15 = arith.constant 0 : index
    %13 = vector.load %arg7[%c0_14, %c0_15] : memref<32x16xf32, #tpu.memory_space<vmem>>, vector<32x16xf32>
    tpu.vector_store %arg7[%c0_14, %c0_15], %12 {strides = array<i32>} : memref<32x16xf32, #tpu.memory_space<vmem>>, vector<32x16xf32>,
    return
  }
}

module attributes {stable_mosaic.version = 11 : i64} {
  func.func @_attention_kernel(%arg0: memref<8x16x2xf32, #tpu.memory_space<vmem>>, %arg1: memref<8x16x2xf32, #tpu.memory_space<vmem>>, %arg2: memref<8x16x2xf32, #tpu.memory_space<vmem>>, %arg3: memref<8x16x2xf32, #tpu.memory_space<vmem>>) attributes {dimension_semantics = [], scalar_prefetch = 0 : i64, scratch_operands = 0 : i64, tpu.core_type = #tpu.core_type<tc>} {
    %c0 = arith.constant 0 : index
    %c0_0 = arith.constant 0 : index
    %c0_1 = arith.constant 0 : index
    %0 = vector.load %arg0[%c0, %c0_0, %c0_1] : memref<8x16x2xf32, #tpu.memory_space<vmem>>, vector<8x16x2xf32>
    %c0_2 = arith.constant 0 : index
    %c0_3 = arith.constant 0 : index
    %c0_4 = arith.constant 0 : index
    %1 = vector.load %arg1[%c0_2, %c0_3, %c0_4] : memref<8x16x2xf32, #tpu.memory_space<vmem>>, vector<8x16x2xf32>
    %c0_5 = arith.constant 0 : index
    %c0_6 = arith.constant 0 : index
    %c0_7 = arith.constant 0 : index
    %2 = vector.load %arg2[%c0_5, %c0_6, %c0_7] : memref<8x16x2xf32, #tpu.memory_space<vmem>>, vector<8x16x2xf32>
    "tpu.trace_start"() <{level = 10 : i32, message = "gsd,gtd->gst"}> : () -> ()
    %cst = arith.constant dense<0.000000e+00> : vector<8x16x16xf32>
    %3 = tpu.matmul %0, %1, %cst {dimension_numbers = #tpu.dot_dimension_numbers<[2], [2], [1], [1], [0, 0, 0, 1, 1, 1], [0], [0]>} : vector<8x16x2xf32>, vector<8x16x2xf32>, vector<8x16x16xf32> -> vector<8x16x16xf32>
    "tpu.trace_stop"() : () -> ()
    %cst_8 = arith.constant 0.176776692 : f32
    %4 = vector.broadcast %cst_8 : f32 to vector<8x16x16xf32>
    %5 = arith.mulf %3, %4 : vector<8x16x16xf32>
    %cst_9 = arith.constant dense<0.000000e+00> : vector<8x16xf32>
    %6 = vector.multi_reduction <add>, %5, %cst_9 [2] : vector<8x16x16xf32> to vector<8x16xf32>
    %7 = vector.shape_cast %6 : vector<8x16xf32> to vector<8x16x1xf32>
    %cst_10 = arith.constant 1.600000e+01 : f32
    %8 = vector.broadcast %cst_10 : f32 to vector<8x16x1xf32>
    %9 = arith.divf %7, %8 : vector<8x16x1xf32>
    %10 = vector.broadcast %9 : vector<8x16x1xf32> to vector<8x16x16xf32>
    %11 = arith.subf %5, %10 : vector<8x16x16xf32>
    %cst_11 = arith.constant 0.000000e+00 : f32
    %12 = vector.broadcast %cst_11 : f32 to vector<8x16x16xf32>
    %13 = arith.cmpf ogt, %11, %12 : vector<8x16x16xf32>
    %cst_12 = arith.constant 0xFF800000 : f32
    %14 = vector.broadcast %cst_12 : f32 to vector<8x16x16xf32>
    %15 = arith.select %13, %5, %14 : vector<8x16x16xi1>, vector<8x16x16xf32>
    %cst_13 = arith.constant dense<0xFF800000> : vector<8x16xf32>
    %16 = vector.multi_reduction <maximumf>, %15, %cst_13 [2] : vector<8x16x16xf32> to vector<8x16xf32>
    %17 = vector.shape_cast %16 : vector<8x16xf32> to vector<8x16x1xf32>
    %18 = vector.broadcast %17 : vector<8x16x1xf32> to vector<8x16x16xf32>
    %19 = arith.subf %15, %18 : vector<8x16x16xf32>
    %20 = math.exp %19 : vector<8x16x16xf32>
    %cst_14 = arith.constant dense<0.000000e+00> : vector<8x16xf32>
    %21 = vector.multi_reduction <add>, %20, %cst_14 [2] : vector<8x16x16xf32> to vector<8x16xf32>
    %22 = vector.shape_cast %21 : vector<8x16xf32> to vector<8x16x1xf32>
    %23 = tpu.reciprocal %22 {approx = true} : vector<8x16x1xf32> -> vector<8x16x1xf32>
    %24 = vector.broadcast %23 : vector<8x16x1xf32> to vector<8x16x16xf32>
    %25 = arith.mulf %20, %24 : vector<8x16x16xf32>
    "tpu.trace_start"() <{level = 10 : i32, message = "gst,gtd->gsd"}> : () -> ()
    %cst_15 = arith.constant dense<0.000000e+00> : vector<8x16x2xf32>
    %26 = tpu.matmul %25, %2, %cst_15 {dimension_numbers = #tpu.dot_dimension_numbers<[2], [1], [1], [2], [0, 0, 0, 1, 1, 2], [0], [0]>} : vector<8x16x16xf32>, vector<8x16x2xf32>, vector<8x16x2xf32> -> vector<8x16x2xf32>
    "tpu.trace_stop"() : () -> ()
    %c0_16 = arith.constant 0 : index
    %c0_17 = arith.constant 0 : index
    %c0_18 = arith.constant 0 : index
    %27 = vector.load %arg3[%c0_16, %c0_17, %c0_18] : memref<8x16x2xf32, #tpu.memory_space<vmem>>, vector<8x16x2xf32>
    tpu.vector_store %arg3[%c0_16, %c0_17, %c0_18], %26 {strides = array<i32>} : memref<8x16x2xf32, #tpu.memory_space<vmem>>, vector<8x16x2xf32>,
    return
  }
}

module attributes {stable_mosaic.version = 11 : i64} {
  func.func @_tail_kernel(%arg0: memref<32x8xf32, #tpu.memory_space<vmem>>, %arg1: memref<32x32xf32, #tpu.memory_space<vmem>>, %arg2: memref<8x32xf32, #tpu.memory_space<vmem>>, %arg3: memref<1x32xf32, #tpu.memory_space<vmem>>, %arg4: memref<1x32xf32, #tpu.memory_space<vmem>>, %arg5: memref<1x32xf32, #tpu.memory_space<vmem>>, %arg6: memref<32x64xf32, #tpu.memory_space<vmem>>, %arg7: memref<1x64xf32, #tpu.memory_space<vmem>>, %arg8: memref<64x32xf32, #tpu.memory_space<vmem>>, %arg9: memref<1x32xf32, #tpu.memory_space<vmem>>, %arg10: memref<32x32xf32, #tpu.memory_space<vmem>>) attributes {dimension_semantics = [], scalar_prefetch = 0 : i64, scratch_operands = 0 : i64, tpu.core_type = #tpu.core_type<tc>} {
    %c0 = arith.constant 0 : index
    %c0_0 = arith.constant 0 : index
    %0 = vector.load %arg1[%c0, %c0_0] : memref<32x32xf32, #tpu.memory_space<vmem>>, vector<32x32xf32>
    %c0_1 = arith.constant 0 : index
    %c0_2 = arith.constant 0 : index
    %1 = vector.load %arg4[%c0_1, %c0_2] : memref<1x32xf32, #tpu.memory_space<vmem>>, vector<1x32xf32>
    %c0_3 = arith.constant 0 : index
    %c0_4 = arith.constant 0 : index
    %2 = vector.load %arg5[%c0_3, %c0_4] : memref<1x32xf32, #tpu.memory_space<vmem>>, vector<1x32xf32>
    %c0_5 = arith.constant 0 : index
    %c0_6 = arith.constant 0 : index
    %3 = vector.load %arg0[%c0_5, %c0_6] : memref<32x8xf32, #tpu.memory_space<vmem>>, vector<32x8xf32>
    %c0_7 = arith.constant 0 : index
    %c0_8 = arith.constant 0 : index
    %4 = vector.load %arg2[%c0_7, %c0_8] : memref<8x32xf32, #tpu.memory_space<vmem>>, vector<8x32xf32>
    %cst = arith.constant dense<0.000000e+00> : vector<32x32xf32>
    %5 = tpu.matmul %3, %4, %cst {dimension_numbers = #tpu.dot_dimension_numbers<[1], [0], [0], [1], [0, 0, 1, 1], [], []>} : vector<32x8xf32>, vector<8x32xf32>, vector<32x32xf32> -> vector<32x32xf32>
    %c0_9 = arith.constant 0 : index
    %c0_10 = arith.constant 0 : index
    %6 = vector.load %arg3[%c0_9, %c0_10] : memref<1x32xf32, #tpu.memory_space<vmem>>, vector<1x32xf32>
    %7 = vector.broadcast %6 : vector<1x32xf32> to vector<32x32xf32>
    %8 = arith.addf %5, %7 : vector<32x32xf32>
    %9 = arith.addf %0, %8 : vector<32x32xf32>
    %cst_11 = arith.constant dense<0.000000e+00> : vector<32xf32>
    %10 = vector.multi_reduction <add>, %9, %cst_11 [1] : vector<32x32xf32> to vector<32xf32>
    %11 = vector.shape_cast %10 : vector<32xf32> to vector<32x1xf32>
    %cst_12 = arith.constant 3.200000e+01 : f32
    %12 = vector.broadcast %cst_12 : f32 to vector<32x1xf32>
    %13 = arith.divf %11, %12 : vector<32x1xf32>
    %14 = vector.broadcast %13 : vector<32x1xf32> to vector<32x32xf32>
    %15 = arith.subf %9, %14 : vector<32x32xf32>
    %16 = arith.mulf %15, %15 : vector<32x32xf32>
    %cst_13 = arith.constant dense<0.000000e+00> : vector<32xf32>
    %17 = vector.multi_reduction <add>, %16, %cst_13 [1] : vector<32x32xf32> to vector<32xf32>
    %18 = vector.shape_cast %17 : vector<32xf32> to vector<32x1xf32>
    %cst_14 = arith.constant 3.200000e+01 : f32
    %19 = vector.broadcast %cst_14 : f32 to vector<32x1xf32>
    %20 = arith.divf %18, %19 : vector<32x1xf32>
    %21 = vector.broadcast %13 : vector<32x1xf32> to vector<32x32xf32>
    %22 = arith.subf %9, %21 : vector<32x32xf32>
    %cst_15 = arith.constant 9.99999974E-6 : f32
    %23 = vector.broadcast %cst_15 : f32 to vector<32x1xf32>
    %24 = arith.addf %20, %23 : vector<32x1xf32>
    %25 = math.rsqrt %24 : vector<32x1xf32>
    %26 = vector.broadcast %25 : vector<32x1xf32> to vector<32x32xf32>
    %27 = arith.mulf %22, %26 : vector<32x32xf32>
    %28 = vector.broadcast %1 : vector<1x32xf32> to vector<32x32xf32>
    %29 = arith.mulf %27, %28 : vector<32x32xf32>
    %30 = vector.broadcast %2 : vector<1x32xf32> to vector<32x32xf32>
    %31 = arith.addf %29, %30 : vector<32x32xf32>
    %c0_16 = arith.constant 0 : index
    %c0_17 = arith.constant 0 : index
    %32 = vector.load %arg6[%c0_16, %c0_17] : memref<32x64xf32, #tpu.memory_space<vmem>>, vector<32x64xf32>
    %cst_18 = arith.constant dense<0.000000e+00> : vector<32x64xf32>
    %33 = tpu.matmul %31, %32, %cst_18 {dimension_numbers = #tpu.dot_dimension_numbers<[1], [0], [0], [1], [0, 0, 1, 1], [], []>} : vector<32x32xf32>, vector<32x64xf32>, vector<32x64xf32> -> vector<32x64xf32>
    %c0_19 = arith.constant 0 : index
    %c0_20 = arith.constant 0 : index
    %34 = vector.load %arg7[%c0_19, %c0_20] : memref<1x64xf32, #tpu.memory_space<vmem>>, vector<1x64xf32>
    %35 = vector.broadcast %34 : vector<1x64xf32> to vector<32x64xf32>
    %36 = arith.addf %33, %35 : vector<32x64xf32>
    %cst_21 = arith.constant 0.000000e+00 : f32
    %37 = vector.broadcast %cst_21 : f32 to vector<32x64xf32>
    %38 = arith.maximumf %36, %37 : vector<32x64xf32>
    %c0_22 = arith.constant 0 : index
    %c0_23 = arith.constant 0 : index
    %39 = vector.load %arg8[%c0_22, %c0_23] : memref<64x32xf32, #tpu.memory_space<vmem>>, vector<64x32xf32>
    %cst_24 = arith.constant dense<0.000000e+00> : vector<32x32xf32>
    %40 = tpu.matmul %38, %39, %cst_24 {dimension_numbers = #tpu.dot_dimension_numbers<[1], [0], [0], [1], [0, 0, 1, 1], [], []>} : vector<32x64xf32>, vector<64x32xf32>, vector<32x32xf32> -> vector<32x32xf32>
    %c0_25 = arith.constant 0 : index
    %c0_26 = arith.constant 0 : index
    %41 = vector.load %arg9[%c0_25, %c0_26] : memref<1x32xf32, #tpu.memory_space<vmem>>, vector<1x32xf32>
    %42 = vector.broadcast %41 : vector<1x32xf32> to vector<32x32xf32>
    %43 = arith.addf %40, %42 : vector<32x32xf32>
    %44 = arith.addf %31, %43 : vector<32x32xf32>
    %cst_27 = arith.constant dense<0.000000e+00> : vector<32xf32>
    %45 = vector.multi_reduction <add>, %44, %cst_27 [1] : vector<32x32xf32> to vector<32xf32>
    %46 = vector.shape_cast %45 : vector<32xf32> to vector<32x1xf32>
    %cst_28 = arith.constant 3.200000e+01 : f32
    %47 = vector.broadcast %cst_28 : f32 to vector<32x1xf32>
    %48 = arith.divf %46, %47 : vector<32x1xf32>
    %49 = vector.broadcast %48 : vector<32x1xf32> to vector<32x32xf32>
    %50 = arith.subf %44, %49 : vector<32x32xf32>
    %51 = arith.mulf %50, %50 : vector<32x32xf32>
    %cst_29 = arith.constant dense<0.000000e+00> : vector<32xf32>
    %52 = vector.multi_reduction <add>, %51, %cst_29 [1] : vector<32x32xf32> to vector<32xf32>
    %53 = vector.shape_cast %52 : vector<32xf32> to vector<32x1xf32>
    %cst_30 = arith.constant 3.200000e+01 : f32
    %54 = vector.broadcast %cst_30 : f32 to vector<32x1xf32>
    %55 = arith.divf %53, %54 : vector<32x1xf32>
    %56 = vector.broadcast %48 : vector<32x1xf32> to vector<32x32xf32>
    %57 = arith.subf %44, %56 : vector<32x32xf32>
    %cst_31 = arith.constant 9.99999974E-6 : f32
    %58 = vector.broadcast %cst_31 : f32 to vector<32x1xf32>
    %59 = arith.addf %55, %58 : vector<32x1xf32>
    %60 = math.rsqrt %59 : vector<32x1xf32>
    %61 = vector.broadcast %60 : vector<32x1xf32> to vector<32x32xf32>
    %62 = arith.mulf %57, %61 : vector<32x32xf32>
    %63 = vector.broadcast %1 : vector<1x32xf32> to vector<32x32xf32>
    %64 = arith.mulf %62, %63 : vector<32x32xf32>
    %65 = vector.broadcast %2 : vector<1x32xf32> to vector<32x32xf32>
    %66 = arith.addf %64, %65 : vector<32x32xf32>
    %67 = arith.addf %66, %0 : vector<32x32xf32>
    %c0_32 = arith.constant 0 : index
    %c0_33 = arith.constant 0 : index
    %68 = vector.load %arg10[%c0_32, %c0_33] : memref<32x32xf32, #tpu.memory_space<vmem>>, vector<32x32xf32>
    tpu.vector_store %arg10[%c0_32, %c0_33], %67 {strides = array<i32>} : memref<32x32xf32, #tpu.memory_space<vmem>>, vector<32x32xf32>,
    return
  }
}

</mosaic_0001>

<llo_original>
// kernel: cross_modal_forward.3
$region0: #{cross_modal_forward.3}
  #allocation0 [shape = 'u32[]', space=smem, size = 0x4, offset = 0x4, fixed_abs, tag = 'smem constant byte address 0x4 - core index']
  #allocation1 [shape = 'u32[144,128]{1,0:T(1,128)}', space=vmem, size = 0x12000, scoped, tag = 'internal scratch']
  %s0 = inlined_call_operand.hbm [shape: f32[32,32], index: 0, kind: input, shape index: {}]
  %s1 = inlined_call_operand.hbm [shape: f32[32,32], index: 1, kind: input, shape index: {}]
  %s2 = inlined_call_operand.vmem [shape: f32[32,8], index: 2, kind: input, shape index: {}]
  %s3 = inlined_call_operand.vmem [shape: f32[1,8], index: 3, kind: input, shape index: {}]
  %s4 = inlined_call_operand.hbm [shape: f32[32,16], index: 4, kind: input, shape index: {}]
  %s5 = inlined_call_operand.vmem [shape: f32[1,16], index: 5, kind: input, shape index: {}]
  %s6 = inlined_call_operand.vmem [shape: f32[32,8], index: 6, kind: output, shape index: {0}]
  %s7 = inlined_call_operand.vmem [shape: f32[32,16], index: 7, kind: output, shape index: {1}]
  %8 = xla_tuple %s6, %s7
  %s9 = sld [smem:[#allocation0]]
  $region54: #{cross_modal_forward.3} parent=0
    _
  %s11 = ssub.s32 1, %s9
  %s12 = scalar_select 0, %s11, %s9
  $region1: #{cross_modal_forward.3} parent=0
    #allocation2 [shape = 'u8[16384]{0}', space=vmem, size = 0x4000, scoped, tag = 'input window, operand 0, single buffered']
    #allocation3 [shape = 's32[1]{0}', space=sflag, size = 0x4, scoped, tag = 'scoped memory for cross_modal_forward.3']
    #allocation4 [shape = 'u8[16384]{0}', space=vmem, size = 0x4000, scoped, tag = 'input window, operand 1, single buffered']
    #allocation5 [shape = 's32[1]{0}', space=sflag, size = 0x4, scoped, tag = 'scoped memory for cross_modal_forward.3']
    #allocation6 [shape = 'u8[16384]{0}', space=vmem, size = 0x4000, scoped, tag = 'input window, operand 4, single buffered']
    %13 = vsyncpa [#allocation3], 0
    %14 = vsyncpa [#allocation5], 0
    // Predicated region
    $region2: #{cross_modal_forward.3} parent=1 // pred_check
      _
    $region3: #{cross_modal_forward.3} parent=1 // pred_check_branch
      %16 = sbr.rel (0) target = $region5
    $region4: #{cross_modal_forward.3} parent=1 // pred_region
      %s18 = ssub.s32 512, 512
      %19 = vsyncadd [#allocation3], %s18
      %s20 = sshll.u32 [#allocation2], 4
      %s21 = int_to_ptr.vmem [resolvable:$true] %s20
      %26 = dma.hbm_to_vmem [thread:$0]  %s0, 512, %s21, [#allocation3], 128, 128, 8
    $region5: #{cross_modal_forward.3} parent=1 // pred_fallthru
      _
    // Predicated region
    $region6: #{cross_modal_forward.3} parent=1 // pred_check
      _
    $region7: #{cross_modal_forward.3} parent=1 // pred_check_branch
      %28 = sbr.rel (0) target = $region9
    $region8: #{cross_modal_forward.3} parent=1 // pred_region
      %s30 = ssub.s32 512, 512
      %31 = vsyncadd [#allocation5], %s30
      %s32 = sshll.u32 [#allocation4], 4
      %s33 = int_to_ptr.vmem [resolvable:$true] %s32
      %38 = dma.hbm_to_vmem [thread:$0]  %s1, 512, %s33, [#allocation5], 128, 128, 8
    $region9: #{cross_modal_forward.3} parent=1 // pred_fallthru
      _
    // Predicated region
    $region10: #{cross_modal_forward.3} parent=1 // pred_check
      _
    $region11: #{cross_modal_forward.3} parent=1 // pred_check_branch
      %40 = sbr.rel (0) target = $region13
    $region12: #{cross_modal_forward.3} parent=1 // pred_region
      _
    $region13: #{cross_modal_forward.3} parent=1 // pred_fallthru
      _
    // Predicated region
    $region14: #{cross_modal_forward.3} parent=1 // pred_check
      _
    $region15: #{cross_modal_forward.3} parent=1 // pred_check_branch
      %42 = sbr.rel (0) target = $region17
    $region16: #{cross_modal_forward.3} parent=1 // pred_region
      _
    $region17: #{cross_modal_forward.3} parent=1 // pred_fallthru
      _
    // Predicated region
    $region18: #{cross_modal_forward.3} parent=1 // pred_check
      _
    $region19: #{cross_modal_forward.3} parent=1 // pred_check_branch
      %44 = sbr.rel (0) target = $region21
    $region20: #{cross_modal_forward.3} parent=1 // pred_region
      %s46 = ssub.s32 512, 512
      %47 = vsyncadd [#allocation5], %s46
      %s48 = sshll.u32 [#allocation6], 4
      %s49 = int_to_ptr.vmem [resolvable:$true] %s48
      %54 = dma.hbm_to_vmem [thread:$0]  %s4, 512, %s49, [#allocation5], 128, 128, 8
    $region21: #{cross_modal_forward.3} parent=1 // pred_fallthru
      _
    // Predicated region
    $region22: #{cross_modal_forward.3} parent=1 // pred_check
      _
    $region23: #{cross_modal_forward.3} parent=1 // pred_check_branch
      %56 = sbr.rel (0) target = $region25
    $region24: #{cross_modal_forward.3} parent=1 // pred_region
      _
    $region25: #{cross_modal_forward.3} parent=1 // pred_fallthru
      _
    // Predicated region
    $region26: #{cross_modal_forward.3} parent=1 // pred_check
      _
    $region27: #{cross_modal_forward.3} parent=1 // pred_check_branch
      %58 = sbr.rel (0) target = $region29
    $region28: #{cross_modal_forward.3} parent=1 // pred_region
      %59 = dma.done [#allocation3], 512
    $region29: #{cross_modal_forward.3} parent=1 // pred_fallthru
      _
    // Predicated region
    $region30: #{cross_modal_forward.3} parent=1 // pred_check
      _
    $region31: #{cross_modal_forward.3} parent=1 // pred_check_branch
      %61 = sbr.rel (0) target = $region33
    $region32: #{cross_modal_forward.3} parent=1 // pred_region
      %62 = dma.done [#allocation5], 512
    $region33: #{cross_modal_forward.3} parent=1 // pred_fallthru
      _
    // Predicated region
    $region34: #{cross_modal_forward.3} parent=1 // pred_check
      _
    $region35: #{cross_modal_forward.3} parent=1 // pred_check_branch
      %64 = sbr.rel (0) target = $region37
    $region36: #{cross_modal_forward.3} parent=1 // pred_region
      %65 = dma.done [#allocation5], 512
    $region37: #{cross_modal_forward.3} parent=1 // pred_fallthru
      _
    %v66 = vld [vmem:[#allocation2] sm:$0xff]
    %v67 = vld [vmem:[#allocation2 + $0x8] sm:$0xff]
    %v68 = vld [vmem:[#allocation2 + $0x10] sm:$0xff]
    %v69 = vld [vmem:[#allocation2 + $0x18] sm:$0xff]
    %v70 = vld [vmem:[%s2] sm:$0xff]
    %v71 = vld [vmem:[%s2 + $0x8] sm:$0xff]
    %v72 = vld [vmem:[%s2 + $0x10] sm:$0xff]
    %v73 = vld [vmem:[%s2 + $0x18] sm:$0xff]
    %v74 = vld [vmem:[%s3] sm:$0x1]
    %v76 = vlaneseq
    %v77 = vshrl.u32 %v76, 7
    %v78 = vsub.s32 0, %v77
    %v79 = vrot.slane %v74, %v78
    %vm81 = vcmask 261120
    %v83 = vsel %vm81, %v66, 0
    %v86 = vsel %vm81, %v67, 0
    %v89 = vsel %vm81, %v68, 0
    %v92 = vsel %vm81, %v69, 0
    %94 = vmatprep.subr.mxu0 0.0
    %95 = vmatpush1.msra.mxu0 %v70
    %96 = vmatprep.subr.mxu0 0.0
    %97 = vmatpush1.msra.mxu0 %v71
    %98 = vmatprep.subr.mxu0 0.0
    %99 = vmatpush1.msra.mxu0 %v72
    %100 = vmatprep.subr.mxu0 0.0
    %101 = vmatpush1.msra.mxu0 %v73
    %102 = vmatprep.subr.mxu0 0.0
    %103 = vmatpush1.msra.mxu0 0.0
    %104 = vmatprep.subr.mxu0 0.0
    %105 = vmatpush1.msra.mxu0 0.0
    %106 = vmatprep.subr.mxu0 0.0
    %107 = vmatpush1.msra.mxu0 0.0
    %108 = vmatprep.subr.mxu0 0.0
    %109 = vmatpush1.msra.mxu0 0.0
    %110 = vmatprep.subr.mxu0 0.0
    %111 = vmatpush1.msra.mxu0 0.0
    %112 = vmatprep.subr.mxu0 0.0
    %113 = vmatpush1.msra.mxu0 0.0
    %114 = vmatprep.subr.mxu0 0.0
    %115 = vmatpush1.msra.mxu0 0.0
    %116 = vmatprep.subr.mxu0 0.0
    %117 = vmatpush1.msra.mxu0 0.0
    %118 = vmatprep.subr.mxu0 0.0
    %119 = vmatpush1.msra.mxu0 0.0
    %120 = vmatprep.subr.mxu0 0.0
    %121 = vmatpush1.msra.mxu0 0.0
    %122 = vmatprep.subr.mxu0 0.0
    %123 = vmatpush1.msra.mxu0 0.0
    %124 = vmatprep.subr.mxu0 0.0
    %125 = vmatpush1.msra.mxu0 0.0
    %126 = vmatprep.subr.mxu0 0.0
    %127 = vmatpush1.msra.mxu0 0.0
    %128 = vmatprep.subr.mxu0 0.0
    %129 = vmatpush1.msra.mxu0 0.0
    %130 = vmatprep.subr.mxu0 0.0
    %131 = vmatpush1.msra.mxu0 0.0
    %132 = vmatprep.subr.mxu0 0.0
    %133 = vmatpush1.msra.mxu0 0.0
    %134 = vmatprep.subr.mxu0 0.0
    %135 = vmatpush1.msra.mxu0 0.0
    %136 = vmatprep.subr.mxu0 0.0
    %137 = vmatpush1.msra.mxu0 0.0
    %138 = vmatprep.subr.mxu0 0.0
    %139 = vmatpush1.msra.mxu0 0.0
    %140 = vmatprep.subr.mxu0 0.0
    %141 = vmatpush1.msra.mxu0 0.0
    %142 = vmatprep.subr.mxu0 0.0
    %143 = vmatpush1.msra.mxu0 0.0
    %144 = vmatprep.subr.mxu0 0.0
    %145 = vmatpush1.msra.mxu0 0.0
    %146 = vmatprep.subr.mxu0 0.0
    %147 = vmatpush1.msra.mxu0 0.0
    %148 = vmatprep.subr.mxu0 0.0
    %149 = vmatpush1.msra.mxu0 0.0
    %150 = vmatprep.subr.mxu0 0.0
    %151 = vmatpush1.msra.mxu0 0.0
    %152 = vmatprep.subr.mxu0 0.0
    %153 = vmatpush1.msra.mxu0 0.0
    %154 = vmatprep.subr.mxu0 0.0
    %155 = vmatpush1.msra.mxu0 0.0
    %156 = vmatprep.subr.mxu0 0.0
    %157 = vmatpush1.msra.mxu0 0.0
    %158 = vmatprep.mubr.f32.mxu0 0.0
    %159 = vmatmul.mubr.f32.gmra.mrb[0].mxu0 %v83
    %v160 = vpop.f32.mrb[0].mxu0
    %v161 = vadd.f32 %v79, %v160
    %v162 = vpop.f32.mrb[0].mxu0
    %163 = vmatprep.mubr.f32.mxu0 0.0
    %164 = vmatmul.mubr.f32.gmra.mrb[0].mxu0 %v86
    %v165 = vpop.f32.mrb[0].mxu0
    %v166 = vadd.f32 %v79, %v165
    %v167 = vpop.f32.mrb[0].mxu0
    %168 = vmatprep.mubr.f32.mxu0 0.0
    %169 = vmatmul.mubr.f32.gmra.mrb[0].mxu0 %v89
    %v170 = vpop.f32.mrb[0].mxu0
    %v171 = vadd.f32 %v79, %v170
    %v172 = vpop.f32.mrb[0].mxu0
    %173 = vmatprep.mubr.f32.mxu0 0.0
    %174 = vmatmul.mubr.f32.gmra.mrb[0].mxu0 %v92
    %v175 = vpop.f32.mrb[0].mxu0
    %v176 = vadd.f32 %v79, %v175
    %v177 = vpop.f32.mrb[0].mxu0
    %178 = vdwg.mxu0
    %vm179 = vcmask 64512
    %180 = vst.msk [vmem:[%s6] sm:$0xff] %vm179, %v161
    %181 = vst.msk [vmem:[%s6 + $0x8] sm:$0xff] %vm179, %v166
    %182 = vst.msk [vmem:[%s6 + $0x10] sm:$0xff] %vm179, %v171
    %183 = vst.msk [vmem:[%s6 + $0x18] sm:$0xff] %vm179, %v176
    %v184 = vld [vmem:[#allocation4] sm:$0xff]
    %v185 = vld [vmem:[#allocation4 + $0x8] sm:$0xff]
    %v186 = vld [vmem:[#allocation4 + $0x10] sm:$0xff]
    %v187 = vld [vmem:[#allocation4 + $0x18] sm:$0xff]
    %v188 = vld [vmem:[#allocation6] sm:$0xff]
    %v189 = vld [vmem:[#allocation6 + $0x8] sm:$0xff]
    %v190 = vld [vmem:[#allocation6 + $0x10] sm:$0xff]
    %v191 = vld [vmem:[#allocation6 + $0x18] sm:$0xff]
    %v192 = vld [vmem:[%s5] sm:$0x1]
    %v194 = vlaneseq
    %v195 = vshrl.u32 %v194, 7
    %v196 = vsub.s32 0, %v195
    %v197 = vrot.slane %v192, %v196
    %v200 = vsel %vm81, %v184, 0
    %v203 = vsel %vm81, %v185, 0
    %v206 = vsel %vm81, %v186, 0
    %v209 = vsel %vm81, %v187, 0
    %211 = vmatprep.subr.mxu0 0.0
    %212 = vmatpush1.msra.mxu0 %v188
    %213 = vmatprep.subr.mxu0 0.0
    %214 = vmatpush1.msra.mxu0 %v189
    %215 = vmatprep.subr.mxu0 0.0
    %216 = vmatpush1.msra.mxu0 %v190
    %217 = vmatprep.subr.mxu0 0.0
    %218 = vmatpush1.msra.mxu0 %v191
    %219 = vmatprep.subr.mxu0 0.0
    %220 = vmatpush1.msra.mxu0 0.0
    %221 = vmatprep.subr.mxu0 0.0
    %222 = vmatpush1.msra.mxu0 0.0
    %223 = vmatprep.subr.mxu0 0.0
    %224 = vmatpush1.msra.mxu0 0.0
    %225 = vmatprep.subr.mxu0 0.0
    %226 = vmatpush1.msra.mxu0 0.0
    %227 = vmatprep.subr.mxu0 0.0
    %228 = vmatpush1.msra.mxu0 0.0
    %229 = vmatprep.subr.mxu0 0.0
    %230 = vmatpush1.msra.mxu0 0.0
    %231 = vmatprep.subr.mxu0 0.0
    %232 = vmatpush1.msra.mxu0 0.0
    %233 = vmatprep.subr.mxu0 0.0
    %234 = vmatpush1.msra.mxu0 0.0
    %235 = vmatprep.subr.mxu0 0.0
    %236 = vmatpush1.msra.mxu0 0.0
    %237 = vmatprep.subr.mxu0 0.0
    %238 = vmatpush1.msra.mxu0 0.0
    %239 = vmatprep.subr.mxu0 0.0
    %240 = vmatpush1.msra.mxu0 0.0
    %241 = vmatprep.subr.mxu0 0.0
    %242 = vmatpush1.msra.mxu0 0.0
    %243 = vmatprep.subr.mxu0 0.0
    %244 = vmatpush1.msra.mxu0 0.0
    %245 = vmatprep.subr.mxu0 0.0
    %246 = vmatpush1.msra.mxu0 0.0
    %247 = vmatprep.subr.mxu0 0.0
    %248 = vmatpush1.msra.mxu0 0.0
    %249 = vmatprep.subr.mxu0 0.0
    %250 = vmatpush1.msra.mxu0 0.0
    %251 = vmatprep.subr.mxu0 0.0
    %252 = vmatpush1.msra.mxu0 0.0
    %253 = vmatprep.subr.mxu0 0.0
    %254 = vmatpush1.msra.mxu0 0.0
    %255 = vmatprep.subr.mxu0 0.0
    %256 = vmatpush1.msra.mxu0 0.0
    %257 = vmatprep.subr.mxu0 0.0
    %258 = vmatpush1.msra.mxu0 0.0
    %259 = vmatprep.subr.mxu0 0.0
    %260 = vmatpush1.msra.mxu0 0.0
    %261 = vmatprep.subr.mxu0 0.0
    %262 = vmatpush1.msra.mxu0 0.0
    %263 = vmatprep.subr.mxu0 0.0
    %264 = vmatpush1.msra.mxu0 0.0
    %265 = vmatprep.subr.mxu0 0.0
    %266 = vmatpush1.msra.mxu0 0.0
    %267 = vmatprep.subr.mxu0 0.0
    %268 = vmatpush1.msra.mxu0 0.0
    %269 = vmatprep.subr.mxu0 0.0
    %270 = vmatpush1.msra.mxu0 0.0
    %271 = vmatprep.subr.mxu0 0.0
    %272 = vmatpush1.msra.mxu0 0.0
    %273 = vmatprep.subr.mxu0 0.0
    %274 = vmatpush1.msra.mxu0 0.0
    %275 = vmatprep.mubr.f32.mxu0 0.0
    %276 = vmatmul.mubr.f32.gmra.mrb[0].mxu0 %v200
    %v277 = vpop.f32.mrb[0].mxu0
    %v278 = vadd.f32 %v197, %v277
    %v279 = vpop.f32.mrb[0].mxu0
    %280 = vmatprep.mubr.f32.mxu0 0.0
    %281 = vmatmul.mubr.f32.gmra.mrb[0].mxu0 %v203
    %v282 = vpop.f32.mrb[0].mxu0
    %v283 = vadd.f32 %v197, %v282
    %v284 = vpop.f32.mrb[0].mxu0
    %285 = vmatprep.mubr.f32.mxu0 0.0
    %286 = vmatmul.mubr.f32.gmra.mrb[0].mxu0 %v206
    %v287 = vpop.f32.mrb[0].mxu0
    %v288 = vadd.f32 %v197, %v287
    %v289 = vpop.f32.mrb[0].mxu0
    %290 = vmatprep.mubr.f32.mxu0 0.0
    %291 = vmatmul.mubr.f32.gmra.mrb[0].mxu0 %v209
    %v292 = vpop.f32.mrb[0].mxu0
    %v293 = vadd.f32 %v197, %v292
    %v294 = vpop.f32.mrb[0].mxu0
    %295 = vdwg.mxu0
    %vm296 = vcmask 130048
    %297 = vst.msk [vmem:[%s7] sm:$0xff] %vm296, %v278
    %298 = vst.msk [vmem:[%s7 + $0x8] sm:$0xff] %vm296, %v283
    %299 = vst.msk [vmem:[%s7 + $0x10] sm:$0xff] %vm296, %v288
    %300 = vst.msk [vmem:[%s7 + $0x18] sm:$0xff] %vm296, %v293
    // Predicated region
    $region38: #{cross_modal_forward.3} parent=1 // pred_check
      _
    $region39: #{cross_modal_forward.3} parent=1 // pred_check_branch
      %302 = sbr.rel (0) target = $region41
    $region40: #{cross_modal_forward.3} parent=1 // pred_region
      _
    $region41: #{cross_modal_forward.3} parent=1 // pred_fallthru
      _
    // Predicated region
    $region42: #{cross_modal_forward.3} parent=1 // pred_check
      _
    $region43: #{cross_modal_forward.3} parent=1 // pred_check_branch
      %304 = sbr.rel (0) target = $region45
    $region44: #{cross_modal_forward.3} parent=1 // pred_region
      _
    $region45: #{cross_modal_forward.3} parent=1 // pred_fallthru
      _
    // Predicated region
    $region46: #{cross_modal_forward.3} parent=1 // pred_check
      _
    $region47: #{cross_modal_forward.3} parent=1 // pred_check_branch
      %306 = sbr.rel (0) target = $region49
    $region48: #{cross_modal_forward.3} parent=1 // pred_region
      _
    $region49: #{cross_modal_forward.3} parent=1 // pred_fallthru
      _
    // Predicated region
    $region50: #{cross_modal_forward.3} parent=1 // pred_check
      _
    $region51: #{cross_modal_forward.3} parent=1 // pred_check_branch
      %308 = sbr.rel (0) target = $region53
    $region52: #{cross_modal_forward.3} parent=1 // pred_region
      _
    $region53: #{cross_modal_forward.3} parent=1 // pred_fallthru
      _
    %309 = vsyncpa [#allocation3], 1
    %310 = vsyncpa [#allocation5], 1

// kernel: cross_modal_forward.5
$region0: #{cross_modal_forward.5}
  #allocation0 [shape = 'u32[]', space=smem, size = 0x4, offset = 0x4, fixed_abs, tag = 'smem constant byte address 0x4 - core index']
  #allocation1 [shape = 'u32[144,128]{1,0:T(1,128)}', space=vmem, size = 0x12000, scoped, tag = 'internal scratch']
  %s0 = inlined_call_operand.vmem [shape: f32[32,8], index: 0, kind: input, shape index: {}]
  %s1 = inlined_call_operand.vmem [shape: f32[32,32], index: 1, kind: input, shape index: {}]
  %s2 = inlined_call_operand.vmem [shape: f32[8,32], index: 2, kind: input, shape index: {}]
  %s3 = inlined_call_operand.vmem [shape: f32[1,32], index: 3, kind: input, shape index: {}]
  %s4 = inlined_call_operand.vmem [shape: f32[1,32], index: 4, kind: input, shape index: {}]
  %s5 = inlined_call_operand.vmem [shape: f32[1,32], index: 5, kind: input, shape index: {}]
  %s6 = inlined_call_operand.vmem [shape: f32[32,64], index: 6, kind: input, shape index: {}]
  %s7 = inlined_call_operand.vmem [shape: f32[1,64], index: 7, kind: input, shape index: {}]
  %s8 = inlined_call_operand.vmem [shape: f32[64,32], index: 8, kind: input, shape index: {}]
  %s9 = inlined_call_operand.vmem [shape: f32[1,32], index: 9, kind: input, shape index: {}]
  %s10 = inlined_call_operand.hbm [shape: f32[32,32], index: 10, kind: output, shape index: {}]
  %s11 = sld [smem:[#allocation0]]
  $region50: #{cross_modal_forward.5} parent=0
    _
  %s13 = ssub.s32 1, %s11
  %s14 = scalar_select 0, %s13, %s11
  $region1: #{cross_modal_forward.5} parent=0
    #allocation2 [shape = 'u8[16384]{0}', space=vmem, size = 0x4000, scoped, tag = 'output window, operand 0, single buffered']
    #allocation3 [shape = 's32[1]{0}', space=sflag, size = 0x4, scoped, tag = 'scoped memory for cross_modal_forward.5']
    %15 = vsyncpa [#allocation3], 0
    // Predicated region
    $region2: #{cross_modal_forward.5} parent=1 // pred_check
      _
    $region3: #{cross_modal_forward.5} parent=1 // pred_check_branch
      %17 = sbr.rel (0) target = $region5
    $region4: #{cross_modal_forward.5} parent=1 // pred_region
      _
    $region5: #{cross_modal_forward.5} parent=1 // pred_fallthru
      _
    // Predicated region
    $region6: #{cross_modal_forward.5} parent=1 // pred_check
      _
    $region7: #{cross_modal_forward.5} parent=1 // pred_check_branch
      %19 = sbr.rel (0) target = $region9
    $region8: #{cross_modal_forward.5} parent=1 // pred_region
      _
    $region9: #{cross_modal_forward.5} parent=1 // pred_fallthru
      _
    // Predicated region
    $region10: #{cross_modal_forward.5} parent=1 // pred_check
      _
    $region11: #{cross_modal_forward.5} parent=1 // pred_check_branch
      %21 = sbr.rel (0) target = $region13
    $region12: #{cross_modal_forward.5} parent=1 // pred_region
      _
    $region13: #{cross_modal_forward.5} parent=1 // pred_fallthru
      _
    // Predicated region
    $region14: #{cross_modal_forward.5} parent=1 // pred_check
      _
    $region15: #{cross_modal_forward.5} parent=1 // pred_check_branch
      %23 = sbr.rel (0) target = $region17
    $region16: #{cross_modal_forward.5} parent=1 // pred_region
      _
    $region17: #{cross_modal_forward.5} parent=1 // pred_fallthru
      _
    // Predicated region
    $region18: #{cross_modal_forward.5} parent=1 // pred_check
      _
    $region19: #{cross_modal_forward.5} parent=1 // pred_check_branch
      %25 = sbr.rel (0) target = $region21
    $region20: #{cross_modal_forward.5} parent=1 // pred_region
      _
    $region21: #{cross_modal_forward.5} parent=1 // pred_fallthru
      _
    // Predicated region
    $region22: #{cross_modal_forward.5} parent=1 // pred_check
      _
    $region23: #{cross_modal_forward.5} parent=1 // pred_check_branch
      %27 = sbr.rel (0) target = $region25
    $region24: #{cross_modal_forward.5} parent=1 // pred_region
      _
    $region25: #{cross_modal_forward.5} parent=1 // pred_fallthru
      _
    // Predicated region
    $region26: #{cross_modal_forward.5} parent=1 // pred_check
      _
    $region27: #{cross_modal_forward.5} parent=1 // pred_check_branch
      %29 = sbr.rel (0) target = $region29
    $region28: #{cross_modal_forward.5} parent=1 // pred_region
      _
    $region29: #{cross_modal_forward.5} parent=1 // pred_fallthru
      _
    // Predicated region
    $region30: #{cross_modal_forward.5} parent=1 // pred_check
      _
    $region31: #{cross_modal_forward.5} parent=1 // pred_check_branch
      %31 = sbr.rel (0) target = $region33
    $region32: #{cross_modal_forward.5} parent=1 // pred_region
      _
    $region33: #{cross_modal_forward.5} parent=1 // pred_fallthru
      _
    // Predicated region
    $region34: #{cross_modal_forward.5} parent=1 // pred_check
      _
    $region35: #{cross_modal_forward.5} parent=1 // pred_check_branch
      %33 = sbr.rel (0) target = $region37
    $region36: #{cross_modal_forward.5} parent=1 // pred_region
      _
    $region37: #{cross_modal_forward.5} parent=1 // pred_fallthru
      _
    // Predicated region
    $region38: #{cross_modal_forward.5} parent=1 // pred_check
      _
    $region39: #{cross_modal_forward.5} parent=1 // pred_check_branch
      %35 = sbr.rel (0) target = $region41
    $region40: #{cross_modal_forward.5} parent=1 // pred_region
      _
    $region41: #{cross_modal_forward.5} parent=1 // pred_fallthru
      _
    %v36 = vld [vmem:[%s1] sm:$0xff]
    %v37 = vld [vmem:[%s1 + $0x8] sm:$0xff]
    %v38 = vld [vmem:[%s1 + $0x10] sm:$0xff]
    %v39 = vld [vmem:[%s1 + $0x18] sm:$0xff]
    %v40 = vld [vmem:[%s4] sm:$0x1]
    %v41 = vld [vmem:[%s5] sm:$0x1]
    %v42 = vld [vmem:[%s0] sm:$0xff]
    %v43 = vld [vmem:[%s0 + $0x8] sm:$0xff]
    %v44 = vld [vmem:[%s0 + $0x10] sm:$0xff]
    %v45 = vld [vmem:[%s0 + $0x18] sm:$0xff]
    %v46 = vld [vmem:[%s2] sm:$0xff]
    %v47 = vld [vmem:[%s3] sm:$0x1]
    %v49 = vlaneseq
    %v50 = vshrl.u32 %v49, 7
    %v51 = vsub.s32 0, %v50
    %v52 = vrot.slane %v47, %v51
    %vm54 = vcmask 64512
    %v56 = vsel %vm54, %v42, 0
    %v59 = vsel %vm54, %v43, 0
    %v62 = vsel %vm54, %v44, 0
    %v65 = vsel %vm54, %v45, 0
    %67 = vmatprep.subr.mxu0 0.0
    %68 = vmatpush1.msra.mxu0 %v46
    %69 = vmatprep.subr.mxu0 0.0
    %70 = vmatpush1.msra.mxu0 0.0
    %71 = vmatprep.subr.mxu0 0.0
    %72 = vmatpush1.msra.mxu0 0.0
    %73 = vmatprep.subr.mxu0 0.0
    %74 = vmatpush1.msra.mxu0 0.0
    %75 = vmatprep.subr.mxu0 0.0
    %76 = vmatpush1.msra.mxu0 0.0
    %77 = vmatprep.subr.mxu0 0.0
    %78 = vmatpush1.msra.mxu0 0.0
    %79 = vmatprep.subr.mxu0 0.0
    %80 = vmatpush1.msra.mxu0 0.0
    %81 = vmatprep.subr.mxu0 0.0
    %82 = vmatpush1.msra.mxu0 0.0
    %83 = vmatprep.subr.mxu0 0.0
    %84 = vmatpush1.msra.mxu0 0.0
    %85 = vmatprep.subr.mxu0 0.0
    %86 = vmatpush1.msra.mxu0 0.0
    %87 = vmatprep.subr.mxu0 0.0
    %88 = vmatpush1.msra.mxu0 0.0
    %89 = vmatprep.subr.mxu0 0.0
    %90 = vmatpush1.msra.mxu0 0.0
    %91 = vmatprep.subr.mxu0 0.0
    %92 = vmatpush1.msra.mxu0 0.0
    %93 = vmatprep.subr.mxu0 0.0
    %94 = vmatpush1.msra.mxu0 0.0
    %95 = vmatprep.subr.mxu0 0.0
    %96 = vmatpush1.msra.mxu0 0.0
    %97 = vmatprep.subr.mxu0 0.0
    %98 = vmatpush1.msra.mxu0 0.0
    %99 = vmatprep.subr.mxu0 0.0
    %100 = vmatpush1.msra.mxu0 0.0
    %101 = vmatprep.subr.mxu0 0.0
    %102 = vmatpush1.msra.mxu0 0.0
    %103 = vmatprep.subr.mxu0 0.0
    %104 = vmatpush1.msra.mxu0 0.0
    %105 = vmatprep.subr.mxu0 0.0
    %106 = vmatpush1.msra.mxu0 0.0
    %107 = vmatprep.subr.mxu0 0.0
    %108 = vmatpush1.msra.mxu0 0.0
    %109 = vmatprep.subr.mxu0 0.0
    %110 = vmatpush1.msra.mxu0 0.0
    %111 = vmatprep.subr.mxu0 0.0
    %112 = vmatpush1.msra.mxu0 0.0
    %113 = vmatprep.subr.mxu0 0.0
    %114 = vmatpush1.msra.mxu0 0.0
    %115 = vmatprep.subr.mxu0 0.0
    %116 = vmatpush1.msra.mxu0 0.0
    %117 = vmatprep.subr.mxu0 0.0
    %118 = vmatpush1.msra.mxu0 0.0
    %119 = vmatprep.subr.mxu0 0.0
    %120 = vmatpush1.msra.mxu0 0.0
    %121 = vmatprep.subr.mxu0 0.0
    %122 = vmatpush1.msra.mxu0 0.0
    %123 = vmatprep.subr.mxu0 0.0
    %124 = vmatpush1.msra.mxu0 0.0
    %125 = vmatprep.subr.mxu0 0.0
    %126 = vmatpush1.msra.mxu0 0.0
    %127 = vmatprep.subr.mxu0 0.0
    %128 = vmatpush1.msra.mxu0 0.0
    %129 = vmatprep.subr.mxu0 0.0
    %130 = vmatpush1.msra.mxu0 0.0
    %131 = vmatprep.mubr.f32.mxu0 0.0
    %132 = vmatmul.mubr.f32.gmra.mrb[0].mxu0 %v56
    %v133 = vpop.f32.mrb[0].mxu0
    %v134 = vadd.f32 %v52, %v133
    %v135 = vpop.f32.mrb[0].mxu0
    %136 = vmatprep.mubr.f32.mxu0 0.0
    %137 = vmatmul.mubr.f32.gmra.mrb[0].mxu0 %v59
    %v138 = vpop.f32.mrb[0].mxu0
    %v139 = vadd.f32 %v52, %v138
    %v140 = vpop.f32.mrb[0].mxu0
    %141 = vmatprep.mubr.f32.mxu0 0.0
    %142 = vmatmul.mubr.f32.gmra.mrb[0].mxu0 %v62
    %v143 = vpop.f32.mrb[0].mxu0
    %v144 = vadd.f32 %v52, %v143
    %v145 = vpop.f32.mrb[0].mxu0
    %146 = vmatprep.mubr.f32.mxu0 0.0
    %147 = vmatmul.mubr.f32.gmra.mrb[0].mxu0 %v65
    %v148 = vpop.f32.mrb[0].mxu0
    %v149 = vadd.f32 %v52, %v148
    %v150 = vpop.f32.mrb[0].mxu0
    %151 = vdwg.mxu0
    %v152 = vadd.f32 %v36, %v134
    %v153 = vadd.f32 %v37, %v139
    %v154 = vadd.f32 %v38, %v144
    %v155 = vadd.f32 %v39, %v149
    %vm156 = vcmask 261120
    %v157 = vsel %vm156, %v152, 0.0
    %158 = vadd.xlane.f32.xlu0 %v157
    %v159 = vpop.xlane.xlu0 %158
    %v160 = vsel %vm156, %v153, 0.0
    %161 = vadd.xlane.f32.xlu0 %v160
    %v162 = vpop.xlane.xlu0 %161
    %v163 = vsel %vm156, %v154, 0.0
    %164 = vadd.xlane.f32.xlu0 %v163
    %v165 = vpop.xlane.xlu0 %164
    %v166 = vsel %vm156, %v155, 0.0
    %167 = vadd.xlane.f32.xlu0 %v166
    %v168 = vpop.xlane.xlu0 %167
    %v169 = vrcp.pop 32.0
    %v170 = vmul.f32 %v159, %v169
    %v171 = vmul.f32 %v162, %v169
    %v172 = vmul.f32 %v165, %v169
    %v173 = vmul.f32 %v168, %v169
    %v174 = vsub.f32 %v152, %v170
    %v175 = vsub.f32 %v153, %v171
    %v176 = vsub.f32 %v154, %v172
    %v177 = vsub.f32 %v155, %v173
    %v178 = vmul.f32 %v174, %v174
    %v179 = vmul.f32 %v175, %v175
    %v180 = vmul.f32 %v176, %v176
    %v181 = vmul.f32 %v177, %v177
    %v182 = vsel %vm156, %v178, 0.0
    %183 = vadd.xlane.f32.xlu0 %v182
    %v184 = vpop.xlane.xlu0 %183
    %v185 = vsel %vm156, %v179, 0.0
    %186 = vadd.xlane.f32.xlu0 %v185
    %v187 = vpop.xlane.xlu0 %186
    %v188 = vsel %vm156, %v180, 0.0
    %189 = vadd.xlane.f32.xlu0 %v188
    %v190 = vpop.xlane.xlu0 %189
    %v191 = vsel %vm156, %v181, 0.0
    %192 = vadd.xlane.f32.xlu0 %v191
    %v193 = vpop.xlane.xlu0 %192
    %v194 = vmul.f32 %v184, %v169
    %v195 = vmul.f32 %v187, %v169
    %v196 = vmul.f32 %v190, %v169
    %v197 = vmul.f32 %v193, %v169
    %v198 = vadd.f32 %v194, 1e-05
    %v199 = vadd.f32 %v195, 1e-05
    %v200 = vadd.f32 %v196, 1e-05
    %v201 = vadd.f32 %v197, 1e-05
    %v202 = vrsqrt.pop %v198
    %v203 = vrsqrt.pop %v199
    %v204 = vrsqrt.pop %v200
    %v205 = vrsqrt.pop %v201
    %v206 = vmul.f32 %v174, %v202
    %v207 = vmul.f32 %v175, %v203
    %v208 = vmul.f32 %v176, %v204
    %v209 = vmul.f32 %v177, %v205
    %v211 = vlaneseq
    %v212 = vshrl.u32 %v211, 7
    %v213 = vsub.s32 0, %v212
    %v214 = vrot.slane %v40, %v213
    %v216 = vmul.f32 %v206, %v214
    %v217 = vmul.f32 %v207, %v214
    %v218 = vmul.f32 %v208, %v214
    %v219 = vmul.f32 %v209, %v214
    %v221 = vlaneseq
    %v222 = vshrl.u32 %v221, 7
    %v223 = vsub.s32 0, %v222
    %v224 = vrot.slane %v41, %v223
    %v226 = vadd.f32 %v216, %v224
    %v227 = vadd.f32 %v217, %v224
    %v228 = vadd.f32 %v218, %v224
    %v229 = vadd.f32 %v219, %v224
    %v230 = vld [vmem:[%s6] sm:$0xff]
    %v231 = vld [vmem:[%s6 + $0x8] sm:$0xff]
    %v232 = vld [vmem:[%s6 + $0x10] sm:$0xff]
    %v233 = vld [vmem:[%s6 + $0x18] sm:$0xff]
    %v234 = vld [vmem:[%s7] sm:$0x1]
    %v236 = vlaneseq
    %v237 = vshrl.u32 %v236, 7
    %v238 = vsub.s32 0, %v237
    %v239 = vrot.slane %v234, %v238
    %v242 = vsel %vm156, %v226, 0
    %v245 = vsel %vm156, %v227, 0
    %v248 = vsel %vm156, %v228, 0
    %v251 = vsel %vm156, %v229, 0
    %253 = vmatprep.subr.mxu0 0.0
    %254 = vmatpush1.msra.mxu0 %v230
    %255 = vmatprep.subr.mxu0 0.0
    %256 = vmatpush1.msra.mxu0 %v231
    %257 = vmatprep.subr.mxu0 0.0
    %258 = vmatpush1.msra.mxu0 %v232
    %259 = vmatprep.subr.mxu0 0.0
    %260 = vmatpush1.msra.mxu0 %v233
    %261 = vmatprep.subr.mxu0 0.0
    %262 = vmatpush1.msra.mxu0 0.0
    %263 = vmatprep.subr.mxu0 0.0
    %264 = vmatpush1.msra.mxu0 0.0
    %265 = vmatprep.subr.mxu0 0.0
    %266 = vmatpush1.msra.mxu0 0.0
    %267 = vmatprep.subr.mxu0 0.0
    %268 = vmatpush1.msra.mxu0 0.0
    %269 = vmatprep.subr.mxu0 0.0
    %270 = vmatpush1.msra.mxu0 0.0
    %271 = vmatprep.subr.mxu0 0.0
    %272 = vmatpush1.msra.mxu0 0.0
    %273 = vmatprep.subr.mxu0 0.0
    %274 = vmatpush1.msra.mxu0 0.0
    %275 = vmatprep.subr.mxu0 0.0
    %276 = vmatpush1.msra.mxu0 0.0
    %277 = vmatprep.subr.mxu0 0.0
    %278 = vmatpush1.msra.mxu0 0.0
    %279 = vmatprep.subr.mxu0 0.0
    %280 = vmatpush1.msra.mxu0 0.0
    %281 = vmatprep.subr.mxu0 0.0
    %282 = vmatpush1.msra.mxu0 0.0
    %283 = vmatprep.subr.mxu0 0.0
    %284 = vmatpush1.msra.mxu0 0.0
    %285 = vmatprep.subr.mxu0 0.0
    %286 = vmatpush1.msra.mxu0 0.0
    %287 = vmatprep.subr.mxu0 0.0
    %288 = vmatpush1.msra.mxu0 0.0
    %289 = vmatprep.subr.mxu0 0.0
    %290 = vmatpush1.msra.mxu0 0.0
    %291 = vmatprep.subr.mxu0 0.0
    %292 = vmatpush1.msra.mxu0 0.0
    %293 = vmatprep.subr.mxu0 0.0
    %294 = vmatpush1.msra.mxu0 0.0
    %295 = vmatprep.subr.mxu0 0.0
    %296 = vmatpush1.msra.mxu0 0.0
    %297 = vmatprep.subr.mxu0 0.0
    %298 = vmatpush1.msra.mxu0 0.0
    %299 = vmatprep.subr.mxu0 0.0
    %300 = vmatpush1.msra.mxu0 0.0
    %301 = vmatprep.subr.mxu0 0.0
    %302 = vmatpush1.msra.mxu0 0.0
    %303 = vmatprep.subr.mxu0 0.0
    %304 = vmatpush1.msra.mxu0 0.0
    %305 = vmatprep.subr.mxu0 0.0
    %306 = vmatpush1.msra.mxu0 0.0
    %307 = vmatprep.subr.mxu0 0.0
    %308 = vmatpush1.msra.mxu0 0.0
    %309 = vmatprep.subr.mxu0 0.0
    %310 = vmatpush1.msra.mxu0 0.0
    %311 = vmatprep.subr.mxu0 0.0
    %312 = vmatpush1.msra.mxu0 0.0
    %313 = vmatprep.subr.mxu0 0.0
    %314 = vmatpush1.msra.mxu0 0.0
    %315 = vmatprep.subr.mxu0 0.0
    %316 = vmatpush1.msra.mxu0 0.0
    %317 = vmatprep.mubr.f32.mxu0 0.0
    %318 = vmatmul.mubr.f32.gmra.mrb[0].mxu0 %v242
    %v319 = vpop.f32.mrb[0].mxu0
    %v320 = vadd.f32 %v239, %v319
    %v321 = vpop.f32.mrb[0].mxu0
    %322 = vmatprep.mubr.f32.mxu0 0.0
    %323 = vmatmul.mubr.f32.gmra.mrb[0].mxu0 %v245
    %v324 = vpop.f32.mrb[0].mxu0
    %v325 = vadd.f32 %v239, %v324
    %v326 = vpop.f32.mrb[0].mxu0
    %327 = vmatprep.mubr.f32.mxu0 0.0
    %328 = vmatmul.mubr.f32.gmra.mrb[0].mxu0 %v248
    %v329 = vpop.f32.mrb[0].mxu0
    %v330 = vadd.f32 %v239, %v329
    %v331 = vpop.f32.mrb[0].mxu0
    %332 = vmatprep.mubr.f32.mxu0 0.0
    %333 = vmatmul.mubr.f32.gmra.mrb[0].mxu0 %v251
    %v334 = vpop.f32.mrb[0].mxu0
    %v335 = vadd.f32 %v239, %v334
    %v336 = vpop.f32.mrb[0].mxu0
    %337 = vdwg.mxu0
    %v338 = vmax.f32 %v320, 0.0
    %v339 = vmax.f32 %v325, 0.0
    %v340 = vmax.f32 %v330, 0.0
    %v341 = vmax.f32 %v335, 0.0
    %v342 = vld [vmem:[%s8] sm:$0xff]
    %v343 = vld [vmem:[%s8 + $0x8] sm:$0xff]
    %v344 = vld [vmem:[%s8 + $0x10] sm:$0xff]
    %v345 = vld [vmem:[%s8 + $0x18] sm:$0xff]
    %v346 = vld [vmem:[%s8 + $0x20] sm:$0xff]
    %v347 = vld [vmem:[%s8 + $0x28] sm:$0xff]
    %v348 = vld [vmem:[%s8 + $0x30] sm:$0xff]
    %v349 = vld [vmem:[%s8 + $0x38] sm:$0xff]
    %v350 = vld [vmem:[%s9] sm:$0x1]
    %v352 = vlaneseq
    %v353 = vshrl.u32 %v352, 7
    %v354 = vsub.s32 0, %v353
    %v355 = vrot.slane %v350, %v354
    %vm357 = vcmask 523264
    %v359 = vsel %vm357, %v338, 0
    %v362 = vsel %vm357, %v339, 0
    %v365 = vsel %vm357, %v340, 0
    %v368 = vsel %vm357, %v341, 0
    %370 = vmatprep.subr.mxu0 0.0
    %371 = vmatpush1.msra.mxu0 %v342
    %372 = vmatprep.subr.mxu0 0.0
    %373 = vmatpush1.msra.mxu0 %v343
    %374 = vmatprep.subr.mxu0 0.0
    %375 = vmatpush1.msra.mxu0 %v344
    %376 = vmatprep.subr.mxu0 0.0
    %377 = vmatpush1.msra.mxu0 %v345
    %378 = vmatprep.subr.mxu0 0.0
    %379 = vmatpush1.msra.mxu0 %v346
    %380 = vmatprep.subr.mxu0 0.0
    %381 = vmatpush1.msra.mxu0 %v347
    %382 = vmatprep.subr.mxu0 0.0
    %383 = vmatpush1.msra.mxu0 %v348
    %384 = vmatprep.subr.mxu0 0.0
    %385 = vmatpush1.msra.mxu0 %v349
    %386 = vmatprep.subr.mxu0 0.0
    %387 = vmatpush1.msra.mxu0 0.0
    %388 = vmatprep.subr.mxu0 0.0
    %389 = vmatpush1.msra.mxu0 0.0
    %390 = vmatprep.subr.mxu0 0.0
    %391 = vmatpush1.msra.mxu0 0.0
    %392 = vmatprep.subr.mxu0 0.0
    %393 = vmatpush1.msra.mxu0 0.0
    %394 = vmatprep.subr.mxu0 0.0
    %395 = vmatpush1.msra.mxu0 0.0
    %396 = vmatprep.subr.mxu0 0.0
    %397 = vmatpush1.msra.mxu0 0.0
    %398 = vmatprep.subr.mxu0 0.0
    %399 = vmatpush1.msra.mxu0 0.0
    %400 = vmatprep.subr.mxu0 0.0
    %401 = vmatpush1.msra.mxu0 0.0
    %402 = vmatprep.subr.mxu0 0.0
    %403 = vmatpush1.msra.mxu0 0.0
    %404 = vmatprep.subr.mxu0 0.0
    %405 = vmatpush1.msra.mxu0 0.0
    %406 = vmatprep.subr.mxu0 0.0
    %407 = vmatpush1.msra.mxu0 0.0
    %408 = vmatprep.subr.mxu0 0.0
    %409 = vmatpush1.msra.mxu0 0.0
    %410 = vmatprep.subr.mxu0 0.0
    %411 = vmatpush1.msra.mxu0 0.0
    %412 = vmatprep.subr.mxu0 0.0
    %413 = vmatpush1.msra.mxu0 0.0
    %414 = vmatprep.subr.mxu0 0.0
    %415 = vmatpush1.msra.mxu0 0.0
    %416 = vmatprep.subr.mxu0 0.0
    %417 = vmatpush1.msra.mxu0 0.0
    %418 = vmatprep.subr.mxu0 0.0
    %419 = vmatpush1.msra.mxu0 0.0
    %420 = vmatprep.subr.mxu0 0.0
    %421 = vmatpush1.msra.mxu0 0.0
    %422 = vmatprep.subr.mxu0 0.0
    %423 = vmatpush1.msra.mxu0 0.0
    %424 = vmatprep.subr.mxu0 0.0
    %425 = vmatpush1.msra.mxu0 0.0
    %426 = vmatprep.subr.mxu0 0.0
    %427 = vmatpush1.msra.mxu0 0.0
    %428 = vmatprep.subr.mxu0 0.0
    %429 = vmatpush1.msra.mxu0 0.0
    %430 = vmatprep.subr.mxu0 0.0
    %431 = vmatpush1.msra.mxu0 0.0
    %432 = vmatprep.subr.mxu0 0.0
    %433 = vmatpush1.msra.mxu0 0.0
    %434 = vmatprep.mubr.f32.mxu0 0.0
    %435 = vmatmul.mubr.f32.gmra.mrb[0].mxu0 %v359
    %v436 = vpop.f32.mrb[0].mxu0
    %v437 = vadd.f32 %v355, %v436
    %v438 = vpop.f32.mrb[0].mxu0
    %439 = vmatprep.mubr.f32.mxu0 0.0
    %440 = vmatmul.mubr.f32.gmra.mrb[0].mxu0 %v362
    %v441 = vpop.f32.mrb[0].mxu0
    %v442 = vadd.f32 %v355, %v441
    %v443 = vpop.f32.mrb[0].mxu0
    %444 = vmatprep.mubr.f32.mxu0 0.0
    %445 = vmatmul.mubr.f32.gmra.mrb[0].mxu0 %v365
    %v446 = vpop.f32.mrb[0].mxu0
    %v447 = vadd.f32 %v355, %v446
    %v448 = vpop.f32.mrb[0].mxu0
    %449 = vmatprep.mubr.f32.mxu0 0.0
    %450 = vmatmul.mubr.f32.gmra.mrb[0].mxu0 %v368
    %v451 = vpop.f32.mrb[0].mxu0
    %v452 = vadd.f32 %v355, %v451
    %v453 = vpop.f32.mrb[0].mxu0
    %454 = vdwg.mxu0
    %v455 = vadd.f32 %v226, %v437
    %v456 = vadd.f32 %v227, %v442
    %v457 = vadd.f32 %v228, %v447
    %v458 = vadd.f32 %v229, %v452
    %v459 = vsel %vm156, %v455, 0.0
    %460 = vadd.xlane.f32.xlu0 %v459
    %v461 = vpop.xlane.xlu0 %460
    %v462 = vsel %vm156, %v456, 0.0
    %463 = vadd.xlane.f32.xlu0 %v462
    %v464 = vpop.xlane.xlu0 %463
    %v465 = vsel %vm156, %v457, 0.0
    %466 = vadd.xlane.f32.xlu0 %v465
    %v467 = vpop.xlane.xlu0 %466
    %v468 = vsel %vm156, %v458, 0.0
    %469 = vadd.xlane.f32.xlu0 %v468
    %v470 = vpop.xlane.xlu0 %469
    %v471 = vmul.f32 %v461, %v169
    %v472 = vmul.f32 %v464, %v169
    %v473 = vmul.f32 %v467, %v169
    %v474 = vmul.f32 %v470, %v169
    %v475 = vsub.f32 %v455, %v471
    %v476 = vsub.f32 %v456, %v472
    %v477 = vsub.f32 %v457, %v473
    %v478 = vsub.f32 %v458, %v474
    %v479 = vmul.f32 %v475, %v475
    %v480 = vmul.f32 %v476, %v476
    %v481 = vmul.f32 %v477, %v477
    %v482 = vmul.f32 %v478, %v478
    %v483 = vsel %vm156, %v479, 0.0
    %484 = vadd.xlane.f32.xlu0 %v483
    %v485 = vpop.xlane.xlu0 %484
    %v486 = vsel %vm156, %v480, 0.0
    %487 = vadd.xlane.f32.xlu0 %v486
    %v488 = vpop.xlane.xlu0 %487
    %v489 = vsel %vm156, %v481, 0.0
    %490 = vadd.xlane.f32.xlu0 %v489
    %v491 = vpop.xlane.xlu0 %490
    %v492 = vsel %vm156, %v482, 0.0
    %493 = vadd.xlane.f32.xlu0 %v492
    %v494 = vpop.xlane.xlu0 %493
    %v495 = vmul.f32 %v485, %v169
    %v496 = vmul.f32 %v488, %v169
    %v497 = vmul.f32 %v491, %v169
    %v498 = vmul.f32 %v494, %v169
    %v499 = vadd.f32 %v495, 1e-05
    %v500 = vadd.f32 %v496, 1e-05
    %v501 = vadd.f32 %v497, 1e-05
    %v502 = vadd.f32 %v498, 1e-05
    %v503 = vrsqrt.pop %v499
    %v504 = vrsqrt.pop %v500
    %v505 = vrsqrt.pop %v501
    %v506 = vrsqrt.pop %v502
    %v507 = vmul.f32 %v475, %v503
    %v508 = vmul.f32 %v476, %v504
    %v509 = vmul.f32 %v477, %v505
    %v510 = vmul.f32 %v478, %v506
    %v511 = vmul.f32 %v507, %v214
    %v512 = vmul.f32 %v508, %v214
    %v513 = vmul.f32 %v509, %v214
    %v514 = vmul.f32 %v510, %v214
    %v515 = vadd.f32 %v511, %v224
    %v516 = vadd.f32 %v512, %v224
    %v517 = vadd.f32 %v513, %v224
    %v518 = vadd.f32 %v514, %v224
    %v519 = vadd.f32 %v515, %v36
    %v520 = vadd.f32 %v516, %v37
    %v521 = vadd.f32 %v517, %v38
    %v522 = vadd.f32 %v518, %v39
    %523 = vst.msk [vmem:[#allocation2] sm:$0xff] %vm156, %v519
    %524 = vst.msk [vmem:[#allocation2 + $0x8] sm:$0xff] %vm156, %v520
    %525 = vst.msk [vmem:[#allocation2 + $0x10] sm:$0xff] %vm156, %v521
    %526 = vst.msk [vmem:[#allocation2 + $0x18] sm:$0xff] %vm156, %v522
    // Predicated region
    $region42: #{cross_modal_forward.5} parent=1 // pred_check
      _
    $region43: #{cross_modal_forward.5} parent=1 // pred_check_branch
      %528 = sbr.rel (0) target = $region45
    $region44: #{cross_modal_forward.5} parent=1 // pred_region
      %s530 = ssub.s32 512, 512
      %531 = vsyncadd [#allocation3], %s530
      %s532 = sshll.u32 [#allocation2], 4
      %s533 = int_to_ptr.vmem [resolvable:$true] %s532
      %538 = dma.vmem_to_hbm [thread:$0]  %s533, 512, %s10, [#allocation3], 128, 128, 8
    $region45: #{cross_modal_forward.5} parent=1 // pred_fallthru
      _
    // Predicated region
    $region46: #{cross_modal_forward.5} parent=1 // pred_check
      _
    $region47: #{cross_modal_forward.5} parent=1 // pred_check_branch
      %540 = sbr.rel (0) target = $region49
    $region48: #{cross_modal_forward.5} parent=1 // pred_region
      %541 = dma.done [#allocation3], 512
    $region49: #{cross_modal_forward.5} parent=1 // pred_fallthru
      _
    %542 = vsyncpa [#allocation3], 1

// kernel: cross_modal_forward.4
$region0: #{cross_modal_forward.4}
  #allocation0 [shape = 'u32[]', space=smem, size = 0x4, offset = 0x4, fixed_abs, tag = 'smem constant byte address 0x4 - core index']
  #allocation1 [shape = 'u32[144,128]{1,0:T(1,128)}', space=vmem, size = 0x12000, scoped, tag = 'internal scratch']
  %s0 = inlined_call_operand.vmem [shape: f32[8,16,2], index: 0, kind: input, shape index: {}]
  %s1 = inlined_call_operand.vmem [shape: f32[8,16,2], index: 1, kind: input, shape index: {}]
  %s2 = inlined_call_operand.vmem [shape: f32[8,16,2], index: 2, kind: input, shape index: {}]
  %s3 = inlined_call_operand.vmem [shape: f32[8,16,2], index: 3, kind: output, shape index: {}]
  %s4 = sld [smem:[#allocation0]]
  $region22: #{cross_modal_forward.4} parent=0
    _
  %s6 = ssub.s32 1, %s4
  %s7 = scalar_select 0, %s6, %s4
  // Predicated region
  $region2: #{cross_modal_forward.4} parent=0 // pred_check
    _
  $region3: #{cross_modal_forward.4} parent=0 // pred_check_branch
    %9 = sbr.rel (0) target = $region5
  $region4: #{cross_modal_forward.4} parent=0 // pred_region
    _
  $region5: #{cross_modal_forward.4} parent=0 // pred_fallthru
    _
  // Predicated region
  $region6: #{cross_modal_forward.4} parent=0 // pred_check
    _
  $region7: #{cross_modal_forward.4} parent=0 // pred_check_branch
    %11 = sbr.rel (0) target = $region9
  $region8: #{cross_modal_forward.4} parent=0 // pred_region
    _
  $region9: #{cross_modal_forward.4} parent=0 // pred_fallthru
    _
  // Predicated region
  $region10: #{cross_modal_forward.4} parent=0 // pred_check
    _
  $region11: #{cross_modal_forward.4} parent=0 // pred_check_branch
    %13 = sbr.rel (0) target = $region13
  $region12: #{cross_modal_forward.4} parent=0 // pred_region
    _
  $region13: #{cross_modal_forward.4} parent=0 // pred_fallthru
    _
  %v14 = vld [vmem:[%s0] sm:$0xff]
  %v15 = vld [vmem:[%s0 + $0x8] sm:$0xff]
  %v16 = vld [vmem:[%s0 + $0x10] sm:$0xff]
  %v17 = vld [vmem:[%s0 + $0x18] sm:$0xff]
  %v18 = vld [vmem:[%s0 + $0x20] sm:$0xff]
  %v19 = vld [vmem:[%s0 + $0x28] sm:$0xff]
  %v20 = vld [vmem:[%s0 + $0x30] sm:$0xff]
  %v21 = vld [vmem:[%s0 + $0x38] sm:$0xff]
  %v22 = vld [vmem:[%s0 + $0x40] sm:$0xff]
  %v23 = vld [vmem:[%s0 + $0x48] sm:$0xff]
  %v24 = vld [vmem:[%s0 + $0x50] sm:$0xff]
  %v25 = vld [vmem:[%s0 + $0x58] sm:$0xff]
  %v26 = vld [vmem:[%s0 + $0x60] sm:$0xff]
  %v27 = vld [vmem:[%s0 + $0x68] sm:$0xff]
  %v28 = vld [vmem:[%s0 + $0x70] sm:$0xff]
  %v29 = vld [vmem:[%s0 + $0x78] sm:$0xff]
  %v30 = vld [vmem:[%s1] sm:$0xff]
  %v31 = vld [vmem:[%s1 + $0x8] sm:$0xff]
  %v32 = vld [vmem:[%s1 + $0x10] sm:$0xff]
  %v33 = vld [vmem:[%s1 + $0x18] sm:$0xff]
  %v34 = vld [vmem:[%s1 + $0x20] sm:$0xff]
  %v35 = vld [vmem:[%s1 + $0x28] sm:$0xff]
  %v36 = vld [vmem:[%s1 + $0x30] sm:$0xff]
  %v37 = vld [vmem:[%s1 + $0x38] sm:$0xff]
  %v38 = vld [vmem:[%s1 + $0x40] sm:$0xff]
  %v39 = vld [vmem:[%s1 + $0x48] sm:$0xff]
  %v40 = vld [vmem:[%s1 + $0x50] sm:$0xff]
  %v41 = vld [vmem:[%s1 + $0x58] sm:$0xff]
  %v42 = vld [vmem:[%s1 + $0x60] sm:$0xff]
  %v43 = vld [vmem:[%s1 + $0x68] sm:$0xff]
  %v44 = vld [vmem:[%s1 + $0x70] sm:$0xff]
  %v45 = vld [vmem:[%s1 + $0x78] sm:$0xff]
  %v46 = vld [vmem:[%s2] sm:$0xff]
  %v47 = vld [vmem:[%s2 + $0x8] sm:$0xff]
  %v48 = vld [vmem:[%s2 + $0x10] sm:$0xff]
  %v49 = vld [vmem:[%s2 + $0x18] sm:$0xff]
  %v50 = vld [vmem:[%s2 + $0x20] sm:$0xff]
  %v51 = vld [vmem:[%s2 + $0x28] sm:$0xff]
  %v52 = vld [vmem:[%s2 + $0x30] sm:$0xff]
  %v53 = vld [vmem:[%s2 + $0x38] sm:$0xff]
  %v54 = vld [vmem:[%s2 + $0x40] sm:$0xff]
  %v55 = vld [vmem:[%s2 + $0x48] sm:$0xff]
  %v56 = vld [vmem:[%s2 + $0x50] sm:$0xff]
  %v57 = vld [vmem:[%s2 + $0x58] sm:$0xff]
  %v58 = vld [vmem:[%s2 + $0x60] sm:$0xff]
  %v59 = vld [vmem:[%s2 + $0x68] sm:$0xff]
  %v60 = vld [vmem:[%s2 + $0x70] sm:$0xff]
  %v61 = vld [vmem:[%s2 + $0x78] sm:$0xff]
  %vm62 = vcmask 15360
  %v64 = vsel %vm62, %v14, 0
  %v67 = vsel %vm62, %v15, 0
  %v70 = vsel %vm62, %v30, 0
  %v73 = vsel %vm62, %v31, 0
  %75 = vmatprep.subr.mxu0 0.0
  %76 = vmatpush1.xpose.msra.mxu0 %v70
  %77 = vmatprep.subr.mxu0 0.0
  %78 = vmatpush1.xpose.msra.mxu0 %v73
  %79 = vmatprep.subr.mxu0 0.0
  %80 = vmatpush1.xpose.msra.mxu0 0.0
  %81 = vmatprep.subr.mxu0 0.0
  %82 = vmatpush1.xpose.msra.mxu0 0.0
  %83 = vmatprep.subr.mxu0 0.0
  %84 = vmatpush1.xpose.msra.mxu0 0.0
  %85 = vmatprep.subr.mxu0 0.0
  %86 = vmatpush1.xpose.msra.mxu0 0.0
  %87 = vmatprep.subr.mxu0 0.0
  %88 = vmatpush1.xpose.msra.mxu0 0.0
  %89 = vmatprep.subr.mxu0 0.0
  %90 = vmatpush1.xpose.msra.mxu0 0.0
  %91 = vmatprep.subr.mxu0 0.0
  %92 = vmatpush1.xpose.msra.mxu0 0.0
  %93 = vmatprep.subr.mxu0 0.0
  %94 = vmatpush1.xpose.msra.mxu0 0.0
  %95 = vmatprep.subr.mxu0 0.0
  %96 = vmatpush1.xpose.msra.mxu0 0.0
  %97 = vmatprep.subr.mxu0 0.0
  %98 = vmatpush1.xpose.msra.mxu0 0.0
  %99 = vmatprep.subr.mxu0 0.0
  %100 = vmatpush1.xpose.msra.mxu0 0.0
  %101 = vmatprep.subr.mxu0 0.0
  %102 = vmatpush1.xpose.msra.mxu0 0.0
  %103 = vmatprep.subr.mxu0 0.0
  %104 = vmatpush1.xpose.msra.mxu0 0.0
  %105 = vmatprep.subr.mxu0 0.0
  %106 = vmatpush1.xpose.msra.mxu0 0.0
  %107 = vmatprep.subr.mxu0 0.0
  %108 = vmatpush1.xpose.msra.mxu0 0.0
  %109 = vmatprep.subr.mxu0 0.0
  %110 = vmatpush1.xpose.msra.mxu0 0.0
  %111 = vmatprep.subr.mxu0 0.0
  %112 = vmatpush1.xpose.msra.mxu0 0.0
  %113 = vmatprep.subr.mxu0 0.0
  %114 = vmatpush1.xpose.msra.mxu0 0.0
  %115 = vmatprep.subr.mxu0 0.0
  %116 = vmatpush1.xpose.msra.mxu0 0.0
  %117 = vmatprep.subr.mxu0 0.0
  %118 = vmatpush1.xpose.msra.mxu0 0.0
  %119 = vmatprep.subr.mxu0 0.0
  %120 = vmatpush1.xpose.msra.mxu0 0.0
  %121 = vmatprep.subr.mxu0 0.0
  %122 = vmatpush1.xpose.msra.mxu0 0.0
  %123 = vmatprep.subr.mxu0 0.0
  %124 = vmatpush1.xpose.msra.mxu0 0.0
  %125 = vmatprep.subr.mxu0 0.0
  %126 = vmatpush1.xpose.msra.mxu0 0.0
  %127 = vmatprep.subr.mxu0 0.0
  %128 = vmatpush1.xpose.msra.mxu0 0.0
  %129 = vmatprep.subr.mxu0 0.0
  %130 = vmatpush1.xpose.msra.mxu0 0.0
  %131 = vmatprep.subr.mxu0 0.0
  %132 = vmatpush1.xpose.msra.mxu0 0.0
  %133 = vmatprep.subr.mxu0 0.0
  %134 = vmatpush1.xpose.msra.mxu0 0.0
  %135 = vmatprep.subr.mxu0 0.0
  %136 = vmatpush1.xpose.msra.mxu0 0.0
  %137 = vmatprep.subr.mxu0 0.0
  %138 = vmatpush1.xpose.msra.mxu0 0.0
  %139 = vmatprep.mubr.f32.mxu0 0.0
  %140 = vmatmul.mubr.f32.gmra.mrb[0].mxu0 %v64
  %v141 = vpop.f32.mrb[0].mxu0
  %v142 = vadd.f32 0.0, %v141
  %v143 = vpop.f32.mrb[0].mxu0
  %144 = vmatprep.mubr.f32.mxu0 0.0
  %145 = vmatmul.mubr.f32.gmra.mrb[0].mxu0 %v67
  %v146 = vpop.f32.mrb[0].mxu0
  %v147 = vadd.f32 0.0, %v146
  %v148 = vpop.f32.mrb[0].mxu0
  %149 = vdwg.mxu0
  %v151 = vsel %vm62, %v16, 0
  %v154 = vsel %vm62, %v17, 0
  %v157 = vsel %vm62, %v32, 0
  %v160 = vsel %vm62, %v33, 0
  %162 = vmatprep.subr.mxu0 0.0
  %163 = vmatpush1.xpose.msra.mxu0 %v157
  %164 = vmatprep.subr.mxu0 0.0
  %165 = vmatpush1.xpose.msra.mxu0 %v160
  %166 = vmatprep.subr.mxu0 0.0
  %167 = vmatpush1.xpose.msra.mxu0 0.0
  %168 = vmatprep.subr.mxu0 0.0
  %169 = vmatpush1.xpose.msra.mxu0 0.0
  %170 = vmatprep.subr.mxu0 0.0
  %171 = vmatpush1.xpose.msra.mxu0 0.0
  %172 = vmatprep.subr.mxu0 0.0
  %173 = vmatpush1.xpose.msra.mxu0 0.0
  %174 = vmatprep.subr.mxu0 0.0
  %175 = vmatpush1.xpose.msra.mxu0 0.0
  %176 = vmatprep.subr.mxu0 0.0
  %177 = vmatpush1.xpose.msra.mxu0 0.0
  %178 = vmatprep.subr.mxu0 0.0
  %179 = vmatpush1.xpose.msra.mxu0 0.0
  %180 = vmatprep.subr.mxu0 0.0
  %181 = vmatpush1.xpose.msra.mxu0 0.0
  %182 = vmatprep.subr.mxu0 0.0
  %183 = vmatpush1.xpose.msra.mxu0 0.0
  %184 = vmatprep.subr.mxu0 0.0
  %185 = vmatpush1.xpose.msra.mxu0 0.0
  %186 = vmatprep.subr.mxu0 0.0
  %187 = vmatpush1.xpose.msra.mxu0 0.0
  %188 = vmatprep.subr.mxu0 0.0
  %189 = vmatpush1.xpose.msra.mxu0 0.0
  %190 = vmatprep.subr.mxu0 0.0
  %191 = vmatpush1.xpose.msra.mxu0 0.0
  %192 = vmatprep.subr.mxu0 0.0
  %193 = vmatpush1.xpose.msra.mxu0 0.0
  %194 = vmatprep.subr.mxu0 0.0
  %195 = vmatpush1.xpose.msra.mxu0 0.0
  %196 = vmatprep.subr.mxu0 0.0
  %197 = vmatpush1.xpose.msra.mxu0 0.0
  %198 = vmatprep.subr.mxu0 0.0
  %199 = vmatpush1.xpose.msra.mxu0 0.0
  %200 = vmatprep.subr.mxu0 0.0
  %201 = vmatpush1.xpose.msra.mxu0 0.0
  %202 = vmatprep.subr.mxu0 0.0
  %203 = vmatpush1.xpose.msra.mxu0 0.0
  %204 = vmatprep.subr.mxu0 0.0
  %205 = vmatpush1.xpose.msra.mxu0 0.0
  %206 = vmatprep.subr.mxu0 0.0
  %207 = vmatpush1.xpose.msra.mxu0 0.0
  %208 = vmatprep.subr.mxu0 0.0
  %209 = vmatpush1.xpose.msra.mxu0 0.0
  %210 = vmatprep.subr.mxu0 0.0
  %211 = vmatpush1.xpose.msra.mxu0 0.0
  %212 = vmatprep.subr.mxu0 0.0
  %213 = vmatpush1.xpose.msra.mxu0 0.0
  %214 = vmatprep.subr.mxu0 0.0
  %215 = vmatpush1.xpose.msra.mxu0 0.0
  %216 = vmatprep.subr.mxu0 0.0
  %217 = vmatpush1.xpose.msra.mxu0 0.0
  %218 = vmatprep.subr.mxu0 0.0
  %219 = vmatpush1.xpose.msra.mxu0 0.0
  %220 = vmatprep.subr.mxu0 0.0
  %221 = vmatpush1.xpose.msra.mxu0 0.0
  %222 = vmatprep.subr.mxu0 0.0
  %223 = vmatpush1.xpose.msra.mxu0 0.0
  %224 = vmatprep.subr.mxu0 0.0
  %225 = vmatpush1.xpose.msra.mxu0 0.0
  %226 = vmatprep.mubr.f32.mxu0 0.0
  %227 = vmatmul.mubr.f32.gmra.mrb[0].mxu0 %v151
  %v228 = vpop.f32.mrb[0].mxu0
  %v229 = vadd.f32 0.0, %v228
  %v230 = vpop.f32.mrb[0].mxu0
  %231 = vmatprep.mubr.f32.mxu0 0.0
  %232 = vmatmul.mubr.f32.gmra.mrb[0].mxu0 %v154
  %v233 = vpop.f32.mrb[0].mxu0
  %v234 = vadd.f32 0.0, %v233
  %v235 = vpop.f32.mrb[0].mxu0
  %236 = vdwg.mxu0
  %v238 = vsel %vm62, %v18, 0
  %v241 = vsel %vm62, %v19, 0
  %v244 = vsel %vm62, %v34, 0
  %v247 = vsel %vm62, %v35, 0
  %249 = vmatprep.subr.mxu0 0.0
  %250 = vmatpush1.xpose.msra.mxu0 %v244
  %251 = vmatprep.subr.mxu0 0.0
  %252 = vmatpush1.xpose.msra.mxu0 %v247
  %253 = vmatprep.subr.mxu0 0.0
  %254 = vmatpush1.xpose.msra.mxu0 0.0
  %255 = vmatprep.subr.mxu0 0.0
  %256 = vmatpush1.xpose.msra.mxu0 0.0
  %257 = vmatprep.subr.mxu0 0.0
  %258 = vmatpush1.xpose.msra.mxu0 0.0
  %259 = vmatprep.subr.mxu0 0.0
  %260 = vmatpush1.xpose.msra.mxu0 0.0
  %261 = vmatprep.subr.mxu0 0.0
  %262 = vmatpush1.xpose.msra.mxu0 0.0
  %263 = vmatprep.subr.mxu0 0.0
  %264 = vmatpush1.xpose.msra.mxu0 0.0
  %265 = vmatprep.subr.mxu0 0.0
  %266 = vmatpush1.xpose.msra.mxu0 0.0
  %267 = vmatprep.subr.mxu0 0.0
  %268 = vmatpush1.xpose.msra.mxu0 0.0
  %269 = vmatprep.subr.mxu0 0.0
  %270 = vmatpush1.xpose.msra.mxu0 0.0
  %271 = vmatprep.subr.mxu0 0.0
  %272 = vmatpush1.xpose.msra.mxu0 0.0
  %273 = vmatprep.subr.mxu0 0.0
  %274 = vmatpush1.xpose.msra.mxu0 0.0
  %275 = vmatprep.subr.mxu0 0.0
  %276 = vmatpush1.xpose.msra.mxu0 0.0
  %277 = vmatprep.subr.mxu0 0.0
  %278 = vmatpush1.xpose.msra.mxu0 0.0
  %279 = vmatprep.subr.mxu0 0.0
  %280 = vmatpush1.xpose.msra.mxu0 0.0
  %281 = vmatprep.subr.mxu0 0.0
  %282 = vmatpush1.xpose.msra.mxu0 0.0
  %283 = vmatprep.subr.mxu0 0.0
  %284 = vmatpush1.xpose.msra.mxu0 0.0
  %285 = vmatprep.subr.mxu0 0.0
  %286 = vmatpush1.xpose.msra.mxu0 0.0
  %287 = vmatprep.subr.mxu0 0.0
  %288 = vmatpush1.xpose.msra.mxu0 0.0
  %289 = vmatprep.subr.mxu0 0.0
  %290 = vmatpush1.xpose.msra.mxu0 0.0
  %291 = vmatprep.subr.mxu0 0.0
  %292 = vmatpush1.xpose.msra.mxu0 0.0
  %293 = vmatprep.subr.mxu0 0.0
  %294 = vmatpush1.xpose.msra.mxu0 0.0
  %295 = vmatprep.subr.mxu0 0.0
  %296 = vmatpush1.xpose.msra.mxu0 0.0
  %297 = vmatprep.subr.mxu0 0.0
  %298 = vmatpush1.xpose.msra.mxu0 0.0
  %299 = vmatprep.subr.mxu0 0.0
  %300 = vmatpush1.xpose.msra.mxu0 0.0
  %301 = vmatprep.subr.mxu0 0.0
  %302 = vmatpush1.xpose.msra.mxu0 0.0
  %303 = vmatprep.subr.mxu0 0.0
  %304 = vmatpush1.xpose.msra.mxu0 0.0
  %305 = vmatprep.subr.mxu0 0.0
  %306 = vmatpush1.xpose.msra.mxu0 0.0
  %307 = vmatprep.subr.mxu0 0.0
  %308 = vmatpush1.xpose.msra.mxu0 0.0
  %309 = vmatprep.subr.mxu0 0.0
  %310 = vmatpush1.xpose.msra.mxu0 0.0
  %311 = vmatprep.subr.mxu0 0.0
  %312 = vmatpush1.xpose.msra.mxu0 0.0
  %313 = vmatprep.mubr.f32.mxu0 0.0
  %314 = vmatmul.mubr.f32.gmra.mrb[0].mxu0 %v238
  %v315 = vpop.f32.mrb[0].mxu0
  %v316 = vadd.f32 0.0, %v315
  %v317 = vpop.f32.mrb[0].mxu0
  %318 = vmatprep.mubr.f32.mxu0 0.0
  %319 = vmatmul.mubr.f32.gmra.mrb[0].mxu0 %v241
  %v320 = vpop.f32.mrb[0].mxu0
  %v321 = vadd.f32 0.0, %v320
  %v322 = vpop.f32.mrb[0].mxu0
  %323 = vdwg.mxu0
  %v325 = vsel %vm62, %v20, 0
  %v328 = vsel %vm62, %v21, 0
  %v331 = vsel %vm62, %v36, 0
  %v334 = vsel %vm62, %v37, 0
  %336 = vmatprep.subr.mxu0 0.0
  %337 = vmatpush1.xpose.msra.mxu0 %v331
  %338 = vmatprep.subr.mxu0 0.0
  %339 = vmatpush1.xpose.msra.mxu0 %v334
  %340 = vmatprep.subr.mxu0 0.0
  %341 = vmatpush1.xpose.msra.mxu0 0.0
  %342 = vmatprep.subr.mxu0 0.0
  %343 = vmatpush1.xpose.msra.mxu0 0.0
  %344 = vmatprep.subr.mxu0 0.0
  %345 = vmatpush1.xpose.msra.mxu0 0.0
  %346 = vmatprep.subr.mxu0 0.0
  %347 = vmatpush1.xpose.msra.mxu0 0.0
  %348 = vmatprep.subr.mxu0 0.0
  %349 = vmatpush1.xpose.msra.mxu0 0.0
  %350 = vmatprep.subr.mxu0 0.0
  %351 = vmatpush1.xpose.msra.mxu0 0.0
  %352 = vmatprep.subr.mxu0 0.0
  %353 = vmatpush1.xpose.msra.mxu0 0.0
  %354 = vmatprep.subr.mxu0 0.0
  %355 = vmatpush1.xpose.msra.mxu0 0.0
  %356 = vmatprep.subr.mxu0 0.0
  %357 = vmatpush1.xpose.msra.mxu0 0.0
  %358 = vmatprep.subr.mxu0 0.0
  %359 = vmatpush1.xpose.msra.mxu0 0.0
  %360 = vmatprep.subr.mxu0 0.0
  %361 = vmatpush1.xpose.msra.mxu0 0.0
  %362 = vmatprep.subr.mxu0 0.0
  %363 = vmatpush1.xpose.msra.mxu0 0.0
  %364 = vmatprep.subr.mxu0 0.0
  %365 = vmatpush1.xpose.msra.mxu0 0.0
  %366 = vmatprep.subr.mxu0 0.0
  %367 = vmatpush1.xpose.msra.mxu0 0.0
  %368 = vmatprep.subr.mxu0 0.0
  %369 = vmatpush1.xpose.msra.mxu0 0.0
  %370 = vmatprep.subr.mxu0 0.0
  %371 = vmatpush1.xpose.msra.mxu0 0.0
  %372 = vmatprep.subr.mxu0 0.0
  %373 = vmatpush1.xpose.msra.mxu0 0.0
  %374 = vmatprep.subr.mxu0 0.0
  %375 = vmatpush1.xpose.msra.mxu0 0.0
  %376 = vmatprep.subr.mxu0 0.0
  %377 = vmatpush1.xpose.msra.mxu0 0.0
  %378 = vmatprep.subr.mxu0 0.0
  %379 = vmatpush1.xpose.msra.mxu0 0.0
  %380 = vmatprep.subr.mxu0 0.0
  %381 = vmatpush1.xpose.msra.mxu0 0.0
  %382 = vmatprep.subr.mxu0 0.0
  %383 = vmatpush1.xpose.msra.mxu0 0.0
  %384 = vmatprep.subr.mxu0 0.0
  %385 = vmatpush1.xpose.msra.mxu0 0.0
  %386 = vmatprep.subr.mxu0 0.0
  %387 = vmatpush1.xpose.msra.mxu0 0.0
  %388 = vmatprep.subr.mxu0 0.0
  %389 = vmatpush1.xpose.msra.mxu0 0.0
  %390 = vmatprep.subr.mxu0 0.0
  %391 = vmatpush1.xpose.msra.mxu0 0.0
  %392 = vmatprep.subr.mxu0 0.0
  %393 = vmatpush1.xpose.msra.mxu0 0.0
  %394 = vmatprep.subr.mxu0 0.0
  %395 = vmatpush1.xpose.msra.mxu0 0.0
  %396 = vmatprep.subr.mxu0 0.0
  %397 = vmatpush1.xpose.msra.mxu0 0.0
  %398 = vmatprep.subr.mxu0 0.0
  %399 = vmatpush1.xpose.msra.mxu0 0.0
  %400 = vmatprep.mubr.f32.mxu0 0.0
  %401 = vmatmul.mubr.f32.gmra.mrb[0].mxu0 %v325
  %v402 = vpop.f32.mrb[0].mxu0
  %v403 = vadd.f32 0.0, %v402
  %v404 = vpop.f32.mrb[0].mxu0
  %405 = vmatprep.mubr.f32.mxu0 0.0
  %406 = vmatmul.mubr.f32.gmra.mrb[0].mxu0 %v328
  %v407 = vpop.f32.mrb[0].mxu0
  %v408 = vadd.f32 0.0, %v407
  %v409 = vpop.f32.mrb[0].mxu0
  %410 = vdwg.mxu0
  %v412 = vsel %vm62, %v22, 0
  %v415 = vsel %vm62, %v23, 0
  %v418 = vsel %vm62, %v38, 0
  %v421 = vsel %vm62, %v39, 0
  %423 = vmatprep.subr.mxu0 0.0
  %424 = vmatpush1.xpose.msra.mxu0 %v418
  %425 = vmatprep.subr.mxu0 0.0
  %426 = vmatpush1.xpose.msra.mxu0 %v421
  %427 = vmatprep.subr.mxu0 0.0
  %428 = vmatpush1.xpose.msra.mxu0 0.0
  %429 = vmatprep.subr.mxu0 0.0
  %430 = vmatpush1.xpose.msra.mxu0 0.0
  %431 = vmatprep.subr.mxu0 0.0
  %432 = vmatpush1.xpose.msra.mxu0 0.0
  %433 = vmatprep.subr.mxu0 0.0
  %434 = vmatpush1.xpose.msra.mxu0 0.0
  %435 = vmatprep.subr.mxu0 0.0
  %436 = vmatpush1.xpose.msra.mxu0 0.0
  %437 = vmatprep.subr.mxu0 0.0
  %438 = vmatpush1.xpose.msra.mxu0 0.0
  %439 = vmatprep.subr.mxu0 0.0
  %440 = vmatpush1.xpose.msra.mxu0 0.0
  %441 = vmatprep.subr.mxu0 0.0
  %442 = vmatpush1.xpose.msra.mxu0 0.0
  %443 = vmatprep.subr.mxu0 0.0
  %444 = vmatpush1.xpose.msra.mxu0 0.0
  %445 = vmatprep.subr.mxu0 0.0
  %446 = vmatpush1.xpose.msra.mxu0 0.0
  %447 = vmatprep.subr.mxu0 0.0
  %448 = vmatpush1.xpose.msra.mxu0 0.0
  %449 = vmatprep.subr.mxu0 0.0
  %450 = vmatpush1.xpose.msra.mxu0 0.0
  %451 = vmatprep.subr.mxu0 0.0
  %452 = vmatpush1.xpose.msra.mxu0 0.0
  %453 = vmatprep.subr.mxu0 0.0
  %454 = vmatpush1.xpose.msra.mxu0 0.0
  %455 = vmatprep.subr.mxu0 0.0
  %456 = vmatpush1.xpose.msra.mxu0 0.0
  %457 = vmatprep.subr.mxu0 0.0
  %458 = vmatpush1.xpose.msra.mxu0 0.0
  %459 = vmatprep.subr.mxu0 0.0
  %460 = vmatpush1.xpose.msra.mxu0 0.0
  %461 = vmatprep.subr.mxu0 0.0
  %462 = vmatpush1.xpose.msra.mxu0 0.0
  %463 = vmatprep.subr.mxu0 0.0
  %464 = vmatpush1.xpose.msra.mxu0 0.0
  %465 = vmatprep.subr.mxu0 0.0
  %466 = vmatpush1.xpose.msra.mxu0 0.0
  %467 = vmatprep.subr.mxu0 0.0
  %468 = vmatpush1.xpose.msra.mxu0 0.0
  %469 = vmatprep.subr.mxu0 0.0
  %470 = vmatpush1.xpose.msra.mxu0 0.0
  %471 = vmatprep.subr.mxu0 0.0
  %472 = vmatpush1.xpose.msra.mxu0 0.0
  %473 = vmatprep.subr.mxu0 0.0
  %474 = vmatpush1.xpose.msra.mxu0 0.0
  %475 = vmatprep.subr.mxu0 0.0
  %476 = vmatpush1.xpose.msra.mxu0 0.0
  %477 = vmatprep.subr.mxu0 0.0
  %478 = vmatpush1.xpose.msra.mxu0 0.0
  %479 = vmatprep.subr.mxu0 0.0
  %480 = vmatpush1.xpose.msra.mxu0 0.0
  %481 = vmatprep.subr.mxu0 0.0
  %482 = vmatpush1.xpose.msra.mxu0 0.0
  %483 = vmatprep.subr.mxu0 0.0
  %484 = vmatpush1.xpose.msra.mxu0 0.0
  %485 = vmatprep.subr.mxu0 0.0
  %486 = vmatpush1.xpose.msra.mxu0 0.0
  %487 = vmatprep.mubr.f32.mxu0 0.0
  %488 = vmatmul.mubr.f32.gmra.mrb[0].mxu0 %v412
  %v489 = vpop.f32.mrb[0].mxu0
  %v490 = vadd.f32 0.0, %v489
  %v491 = vpop.f32.mrb[0].mxu0
  %492 = vmatprep.mubr.f32.mxu0 0.0
  %493 = vmatmul.mubr.f32.gmra.mrb[0].mxu0 %v415
  %v494 = vpop.f32.mrb[0].mxu0
  %v495 = vadd.f32 0.0, %v494
  %v496 = vpop.f32.mrb[0].mxu0
  %497 = vdwg.mxu0
  %v499 = vsel %vm62, %v24, 0
  %v502 = vsel %vm62, %v25, 0
  %v505 = vsel %vm62, %v40, 0
  %v508 = vsel %vm62, %v41, 0
  %510 = vmatprep.subr.mxu0 0.0
  %511 = vmatpush1.xpose.msra.mxu0 %v505
  %512 = vmatprep.subr.mxu0 0.0
  %513 = vmatpush1.xpose.msra.mxu0 %v508
  %514 = vmatprep.subr.mxu0 0.0
  %515 = vmatpush1.xpose.msra.mxu0 0.0
  %516 = vmatprep.subr.mxu0 0.0
  %517 = vmatpush1.xpose.msra.mxu0 0.0
  %518 = vmatprep.subr.mxu0 0.0
  %519 = vmatpush1.xpose.msra.mxu0 0.0
  %520 = vmatprep.subr.mxu0 0.0
  %521 = vmatpush1.xpose.msra.mxu0 0.0
  %522 = vmatprep.subr.mxu0 0.0
  %523 = vmatpush1.xpose.msra.mxu0 0.0
  %524 = vmatprep.subr.mxu0 0.0
  %525 = vmatpush1.xpose.msra.mxu0 0.0
  %526 = vmatprep.subr.mxu0 0.0
  %527 = vmatpush1.xpose.msra.mxu0 0.0
  %528 = vmatprep.subr.mxu0 0.0
  %529 = vmatpush1.xpose.msra.mxu0 0.0
  %530 = vmatprep.subr.mxu0 0.0
  %531 = vmatpush1.xpose.msra.mxu0 0.0
  %532 = vmatprep.subr.mxu0 0.0
  %533 = vmatpush1.xpose.msra.mxu0 0.0
  %534 = vmatprep.subr.mxu0 0.0
  %535 = vmatpush1.xpose.msra.mxu0 0.0
  %536 = vmatprep.subr.mxu0 0.0
  %537 = vmatpush1.xpose.msra.mxu0 0.0
  %538 = vmatprep.subr.mxu0 0.0
  %539 = vmatpush1.xpose.msra.mxu0 0.0
  %540 = vmatprep.subr.mxu0 0.0
  %541 = vmatpush1.xpose.msra.mxu0 0.0
  %542 = vmatprep.subr.mxu0 0.0
  %543 = vmatpush1.xpose.msra.mxu0 0.0
  %544 = vmatprep.subr.mxu0 0.0
  %545 = vmatpush1.xpose.msra.mxu0 0.0
  %546 = vmatprep.subr.mxu0 0.0
  %547 = vmatpush1.xpose.msra.mxu0 0.0
  %548 = vmatprep.subr.mxu0 0.0
  %549 = vmatpush1.xpose.msra.mxu0 0.0
  %550 = vmatprep.subr.mxu0 0.0
  %551 = vmatpush1.xpose.msra.mxu0 0.0
  %552 = vmatprep.subr.mxu0 0.0
  %553 = vmatpush1.xpose.msra.mxu0 0.0
  %554 = vmatprep.subr.mxu0 0.0
  %555 = vmatpush1.xpose.msra.mxu0 0.0
  %556 = vmatprep.subr.mxu0 0.0
  %557 = vmatpush1.xpose.msra.mxu0 0.0
  %558 = vmatprep.subr.mxu0 0.0
  %559 = vmatpush1.xpose.msra.mxu0 0.0
  %560 = vmatprep.subr.mxu0 0.0
  %561 = vmatpush1.xpose.msra.mxu0 0.0
  %562 = vmatprep.subr.mxu0 0.0
  %563 = vmatpush1.xpose.msra.mxu0 0.0
  %564 = vmatprep.subr.mxu0 0.0
  %565 = vmatpush1.xpose.msra.mxu0 0.0
  %566 = vmatprep.subr.mxu0 0.0
  %567 = vmatpush1.xpose.msra.mxu0 0.0
  %568 = vmatprep.subr.mxu0 0.0
  %569 = vmatpush1.xpose.msra.mxu0 0.0
  %570 = vmatprep.subr.mxu0 0.0
  %571 = vmatpush1.xpose.msra.mxu0 0.0
  %572 = vmatprep.subr.mxu0 0.0
  %573 = vmatpush1.xpose.msra.mxu0 0.0
  %574 = vmatprep.mubr.f32.mxu0 0.0
  %575 = vmatmul.mubr.f32.gmra.mrb[0].mxu0 %v499
  %v576 = vpop.f32.mrb[0].mxu0
  %v577 = vadd.f32 0.0, %v576
  %v578 = vpop.f32.mrb[0].mxu0
  %579 = vmatprep.mubr.f32.mxu0 0.0
  %580 = vmatmul.mubr.f32.gmra.mrb[0].mxu0 %v502
  %v581 = vpop.f32.mrb[0].mxu0
  %v582 = vadd.f32 0.0, %v581
  %v583 = vpop.f32.mrb[0].mxu0
  %584 = vdwg.mxu0
  %v586 = vsel %vm62, %v26, 0
  %v589 = vsel %vm62, %v27, 0
  %v592 = vsel %vm62, %v42, 0
  %v595 = vsel %vm62, %v43, 0
  %597 = vmatprep.subr.mxu0 0.0
  %598 = vmatpush1.xpose.msra.mxu0 %v592
  %599 = vmatprep.subr.mxu0 0.0
  %600 = vmatpush1.xpose.msra.mxu0 %v595
  %601 = vmatprep.subr.mxu0 0.0
  %602 = vmatpush1.xpose.msra.mxu0 0.0
  %603 = vmatprep.subr.mxu0 0.0
  %604 = vmatpush1.xpose.msra.mxu0 0.0
  %605 = vmatprep.subr.mxu0 0.0
  %606 = vmatpush1.xpose.msra.mxu0 0.0
  %607 = vmatprep.subr.mxu0 0.0
  %608 = vmatpush1.xpose.msra.mxu0 0.0
  %609 = vmatprep.subr.mxu0 0.0
  %610 = vmatpush1.xpose.msra.mxu0 0.0
  %611 = vmatprep.subr.mxu0 0.0
  %612 = vmatpush1.xpose.msra.mxu0 0.0
  %613 = vmatprep.subr.mxu0 0.0
  %614 = vmatpush1.xpose.msra.mxu0 0.0
  %615 = vmatprep.subr.mxu0 0.0
  %616 = vmatpush1.xpose.msra.mxu0 0.0
  %617 = vmatprep.subr.mxu0 0.0
  %618 = vmatpush1.xpose.msra.mxu0 0.0
  %619 = vmatprep.subr.mxu0 0.0
  %620 = vmatpush1.xpose.msra.mxu0 0.0
  %621 = vmatprep.subr.mxu0 0.0
  %622 = vmatpush1.xpose.msra.mxu0 0.0
  %623 = vmatprep.subr.mxu0 0.0
  %624 = vmatpush1.xpose.msra.mxu0 0.0
  %625 = vmatprep.subr.mxu0 0.0
  %626 = vmatpush1.xpose.msra.mxu0 0.0
  %627 = vmatprep.subr.mxu0 0.0
  %628 = vmatpush1.xpose.msra.mxu0 0.0
  %629 = vmatprep.subr.mxu0 0.0
  %630 = vmatpush1.xpose.msra.mxu0 0.0
  %631 = vmatprep.subr.mxu0 0.0
  %632 = vmatpush1.xpose.msra.mxu0 0.0
  %633 = vmatprep.subr.mxu0 0.0
  %634 = vmatpush1.xpose.msra.mxu0 0.0
  %635 = vmatprep.subr.mxu0 0.0
  %636 = vmatpush1.xpose.msra.mxu0 0.0
  %637 = vmatprep.subr.mxu0 0.0
  %638 = vmatpush1.xpose.msra.mxu0 0.0
  %639 = vmatprep.subr.mxu0 0.0
  %640 = vmatpush1.xpose.msra.mxu0 0.0
  %641 = vmatprep.subr.mxu0 0.0
  %642 = vmatpush1.xpose.msra.mxu0 0.0
  %643 = vmatprep.subr.mxu0 0.0
  %644 = vmatpush1.xpose.msra.mxu0 0.0
  %645 = vmatprep.subr.mxu0 0.0
  %646 = vmatpush1.xpose.msra.mxu0 0.0
  %647 = vmatprep.subr.mxu0 0.0
  %648 = vmatpush1.xpose.msra.mxu0 0.0
  %649 = vmatprep.subr.mxu0 0.0
  %650 = vmatpush1.xpose.msra.mxu0 0.0
  %651 = vmatprep.subr.mxu0 0.0
  %652 = vmatpush1.xpose.msra.mxu0 0.0
  %653 = vmatprep.subr.mxu0 0.0
  %654 = vmatpush1.xpose.msra.mxu0 0.0
  %655 = vmatprep.subr.mxu0 0.0
  %656 = vmatpush1.xpose.msra.mxu0 0.0
  %657 = vmatprep.subr.mxu0 0.0
  %658 = vmatpush1.xpose.msra.mxu0 0.0
  %659 = vmatprep.subr.mxu0 0.0
  %660 = vmatpush1.xpose.msra.mxu0 0.0
  %661 = vmatprep.mubr.f32.mxu0 0.0
  %662 = vmatmul.mubr.f32.gmra.mrb[0].mxu0 %v586
  %v663 = vpop.f32.mrb[0].mxu0
  %v664 = vadd.f32 0.0, %v663
  %v665 = vpop.f32.mrb[0].mxu0
  %666 = vmatprep.mubr.f32.mxu0 0.0
  %667 = vmatmul.mubr.f32.gmra.mrb[0].mxu0 %v589
  %v668 = vpop.f32.mrb[0].mxu0
  %v669 = vadd.f32 0.0, %v668
  %v670 = vpop.f32.mrb[0].mxu0
  %671 = vdwg.mxu0
  %v673 = vsel %vm62, %v28, 0
  %v676 = vsel %vm62, %v29, 0
  %v679 = vsel %vm62, %v44, 0
  %v682 = vsel %vm62, %v45, 0
  %684 = vmatprep.subr.mxu0 0.0
  %685 = vmatpush1.xpose.msra.mxu0 %v679
  %686 = vmatprep.subr.mxu0 0.0
  %687 = vmatpush1.xpose.msra.mxu0 %v682
  %688 = vmatprep.subr.mxu0 0.0
  %689 = vmatpush1.xpose.msra.mxu0 0.0
  %690 = vmatprep.subr.mxu0 0.0
  %691 = vmatpush1.xpose.msra.mxu0 0.0
  %692 = vmatprep.subr.mxu0 0.0
  %693 = vmatpush1.xpose.msra.mxu0 0.0
  %694 = vmatprep.subr.mxu0 0.0
  %695 = vmatpush1.xpose.msra.mxu0 0.0
  %696 = vmatprep.subr.mxu0 0.0
  %697 = vmatpush1.xpose.msra.mxu0 0.0
  %698 = vmatprep.subr.mxu0 0.0
  %699 = vmatpush1.xpose.msra.mxu0 0.0
  %700 = vmatprep.subr.mxu0 0.0
  %701 = vmatpush1.xpose.msra.mxu0 0.0
  %702 = vmatprep.subr.mxu0 0.0
  %703 = vmatpush1.xpose.msra.mxu0 0.0
  %704 = vmatprep.subr.mxu0 0.0
  %705 = vmatpush1.xpose.msra.mxu0 0.0
  %706 = vmatprep.subr.mxu0 0.0
  %707 = vmatpush1.xpose.msra.mxu0 0.0
  %708 = vmatprep.subr.mxu0 0.0
  %709 = vmatpush1.xpose.msra.mxu0 0.0
  %710 = vmatprep.subr.mxu0 0.0
  %711 = vmatpush1.xpose.msra.mxu0 0.0
  %712 = vmatprep.subr.mxu0 0.0
  %713 = vmatpush1.xpose.msra.mxu0 0.0
  %714 = vmatprep.subr.mxu0 0.0
  %715 = vmatpush1.xpose.msra.mxu0 0.0
  %716 = vmatprep.subr.mxu0 0.0
  %717 = vmatpush1.xpose.msra.mxu0 0.0
  %718 = vmatprep.subr.mxu0 0.0
  %719 = vmatpush1.xpose.msra.mxu0 0.0
  %720 = vmatprep.subr.mxu0 0.0
  %721 = vmatpush1.xpose.msra.mxu0 0.0
  %722 = vmatprep.subr.mxu0 0.0
  %723 = vmatpush1.xpose.msra.mxu0 0.0
  %724 = vmatprep.subr.mxu0 0.0
  %725 = vmatpush1.xpose.msra.mxu0 0.0
  %726 = vmatprep.subr.mxu0 0.0
  %727 = vmatpush1.xpose.msra.mxu0 0.0
  %728 = vmatprep.subr.mxu0 0.0
  %729 = vmatpush1.xpose.msra.mxu0 0.0
  %730 = vmatprep.subr.mxu0 0.0
  %731 = vmatpush1.xpose.msra.mxu0 0.0
  %732 = vmatprep.subr.mxu0 0.0
  %733 = vmatpush1.xpose.msra.mxu0 0.0
  %734 = vmatprep.subr.mxu0 0.0
  %735 = vmatpush1.xpose.msra.mxu0 0.0
  %736 = vmatprep.subr.mxu0 0.0
  %737 = vmatpush1.xpose.msra.mxu0 0.0
  %738 = vmatprep.subr.mxu0 0.0
  %739 = vmatpush1.xpose.msra.mxu0 0.0
  %740 = vmatprep.subr.mxu0 0.0
  %741 = vmatpush1.xpose.msra.mxu0 0.0
  %742 = vmatprep.subr.mxu0 0.0
  %743 = vmatpush1.xpose.msra.mxu0 0.0
  %744 = vmatprep.subr.mxu0 0.0
  %745 = vmatpush1.xpose.msra.mxu0 0.0
  %746 = vmatprep.subr.mxu0 0.0
  %747 = vmatpush1.xpose.msra.mxu0 0.0
  %748 = vmatprep.mubr.f32.mxu0 0.0
  %749 = vmatmul.mubr.f32.gmra.mrb[0].mxu0 %v673
  %v750 = vpop.f32.mrb[0].mxu0
  %v751 = vadd.f32 0.0, %v750
  %v752 = vpop.f32.mrb[0].mxu0
  %753 = vmatprep.mubr.f32.mxu0 0.0
  %754 = vmatmul.mubr.f32.gmra.mrb[0].mxu0 %v676
  %v755 = vpop.f32.mrb[0].mxu0
  %v756 = vadd.f32 0.0, %v755
  %v757 = vpop.f32.mrb[0].mxu0
  %758 = vdwg.mxu0
  %v759 = vmul.f32 %v142, 0.17677669
  %v760 = vmul.f32 %v147, 0.17677669
  %v761 = vmul.f32 %v229, 0.17677669
  %v762 = vmul.f32 %v234, 0.17677669
  %v763 = vmul.f32 %v316, 0.17677669
  %v764 = vmul.f32 %v321, 0.17677669
  %v765 = vmul.f32 %v403, 0.17677669
  %v766 = vmul.f32 %v408, 0.17677669
  %v767 = vmul.f32 %v490, 0.17677669
  %v768 = vmul.f32 %v495, 0.17677669
  %v769 = vmul.f32 %v577, 0.17677669
  %v770 = vmul.f32 %v582, 0.17677669
  %v771 = vmul.f32 %v664, 0.17677669
  %v772 = vmul.f32 %v669, 0.17677669
  %v773 = vmul.f32 %v751, 0.17677669
  %v774 = vmul.f32 %v756, 0.17677669
  %vm775 = vcmask 130048
  %v776 = vsel %vm775, %v759, 0.0
  %777 = vadd.xlane.f32.xlu0 %v776
  %v778 = vpop.xlane.xlu0 %777
  %v779 = vsel %vm775, %v760, 0.0
  %780 = vadd.xlane.f32.xlu0 %v779
  %v781 = vpop.xlane.xlu0 %780
  %v782 = vsel %vm775, %v761, 0.0
  %783 = vadd.xlane.f32.xlu0 %v782
  %v784 = vpop.xlane.xlu0 %783
  %v785 = vsel %vm775, %v762, 0.0
  %786 = vadd.xlane.f32.xlu0 %v785
  %v787 = vpop.xlane.xlu0 %786
  %v788 = vsel %vm775, %v763, 0.0
  %789 = vadd.xlane.f32.xlu0 %v788
  %v790 = vpop.xlane.xlu0 %789
  %v791 = vsel %vm775, %v764, 0.0
  %792 = vadd.xlane.f32.xlu0 %v791
  %v793 = vpop.xlane.xlu0 %792
  %v794 = vsel %vm775, %v765, 0.0
  %795 = vadd.xlane.f32.xlu0 %v794
  %v796 = vpop.xlane.xlu0 %795
  %v797 = vsel %vm775, %v766, 0.0
  %798 = vadd.xlane.f32.xlu0 %v797
  %v799 = vpop.xlane.xlu0 %798
  %v800 = vsel %vm775, %v767, 0.0
  %801 = vadd.xlane.f32.xlu0 %v800
  %v802 = vpop.xlane.xlu0 %801
  %v803 = vsel %vm775, %v768, 0.0
  %804 = vadd.xlane.f32.xlu0 %v803
  %v805 = vpop.xlane.xlu0 %804
  %v806 = vsel %vm775, %v769, 0.0
  %807 = vadd.xlane.f32.xlu0 %v806
  %v808 = vpop.xlane.xlu0 %807
  %v809 = vsel %vm775, %v770, 0.0
  %810 = vadd.xlane.f32.xlu0 %v809
  %v811 = vpop.xlane.xlu0 %810
  %v812 = vsel %vm775, %v771, 0.0
  %813 = vadd.xlane.f32.xlu0 %v812
  %v814 = vpop.xlane.xlu0 %813
  %v815 = vsel %vm775, %v772, 0.0
  %816 = vadd.xlane.f32.xlu0 %v815
  %v817 = vpop.xlane.xlu0 %816
  %v818 = vsel %vm775, %v773, 0.0
  %819 = vadd.xlane.f32.xlu0 %v818
  %v820 = vpop.xlane.xlu0 %819
  %v821 = vsel %vm775, %v774, 0.0
  %822 = vadd.xlane.f32.xlu0 %v821
  %v823 = vpop.xlane.xlu0 %822
  %v824 = vrcp.pop 16.0
  %v825 = vmul.f32 %v778, %v824
  %v826 = vmul.f32 %v781, %v824
  %v827 = vmul.f32 %v784, %v824
  %v828 = vmul.f32 %v787, %v824
  %v829 = vmul.f32 %v790, %v824
  %v830 = vmul.f32 %v793, %v824
  %v831 = vmul.f32 %v796, %v824
  %v832 = vmul.f32 %v799, %v824
  %v833 = vmul.f32 %v802, %v824
  %v834 = vmul.f32 %v805, %v824
  %v835 = vmul.f32 %v808, %v824
  %v836 = vmul.f32 %v811, %v824
  %v837 = vmul.f32 %v814, %v824
  %v838 = vmul.f32 %v817, %v824
  %v839 = vmul.f32 %v820, %v824
  %v840 = vmul.f32 %v823, %v824
  %v841 = vsub.f32 %v759, %v825
  %v842 = vsub.f32 %v760, %v826
  %v843 = vsub.f32 %v761, %v827
  %v844 = vsub.f32 %v762, %v828
  %v845 = vsub.f32 %v763, %v829
  %v846 = vsub.f32 %v764, %v830
  %v847 = vsub.f32 %v765, %v831
  %v848 = vsub.f32 %v766, %v832
  %v849 = vsub.f32 %v767, %v833
  %v850 = vsub.f32 %v768, %v834
  %v851 = vsub.f32 %v769, %v835
  %v852 = vsub.f32 %v770, %v836
  %v853 = vsub.f32 %v771, %v837
  %v854 = vsub.f32 %v772, %v838
  %v855 = vsub.f32 %v773, %v839
  %v856 = vsub.f32 %v774, %v840
  %vm857 = vcmp.gt.f32.partialorder %v841, 0.0
  %vm858 = vcmp.gt.f32.partialorder %v842, 0.0
  %vm859 = vcmp.gt.f32.partialorder %v843, 0.0
  %vm860 = vcmp.gt.f32.partialorder %v844, 0.0
  %vm861 = vcmp.gt.f32.partialorder %v845, 0.0
  %vm862 = vcmp.gt.f32.partialorder %v846, 0.0
  %vm863 = vcmp.gt.f32.partialorder %v847, 0.0
  %vm864 = vcmp.gt.f32.partialorder %v848, 0.0
  %vm865 = vcmp.gt.f32.partialorder %v849, 0.0
  %vm866 = vcmp.gt.f32.partialorder %v850, 0.0
  %vm867 = vcmp.gt.f32.partialorder %v851, 0.0
  %vm868 = vcmp.gt.f32.partialorder %v852, 0.0
  %vm869 = vcmp.gt.f32.partialorder %v853, 0.0
  %vm870 = vcmp.gt.f32.partialorder %v854, 0.0
  %vm871 = vcmp.gt.f32.partialorder %v855, 0.0
  %vm872 = vcmp.gt.f32.partialorder %v856, 0.0
  %v873 = vsel %vm857, %v759, -inf
  %v874 = vsel %vm858, %v760, -inf
  %v875 = vsel %vm859, %v761, -inf
  %v876 = vsel %vm860, %v762, -inf
  %v877 = vsel %vm861, %v763, -inf
  %v878 = vsel %vm862, %v764, -inf
  %v879 = vsel %vm863, %v765, -inf
  %v880 = vsel %vm864, %v766, -inf
  %v881 = vsel %vm865, %v767, -inf
  %v882 = vsel %vm866, %v768, -inf
  %v883 = vsel %vm867, %v769, -inf
  %v884 = vsel %vm868, %v770, -inf
  %v885 = vsel %vm869, %v771, -inf
  %v886 = vsel %vm870, %v772, -inf
  %v887 = vsel %vm871, %v773, -inf
  %v888 = vsel %vm872, %v774, -inf
  %v889 = vsel %vm775, %v873, -inf
  %890 = vmax.xlane.f32.xlu0 %v889
  %v891 = vpop.xlane.xlu0 %890
  %v892 = vsel %vm775, %v874, -inf
  %893 = vmax.xlane.f32.xlu0 %v892
  %v894 = vpop.xlane.xlu0 %893
  %v895 = vsel %vm775, %v875, -inf
  %896 = vmax.xlane.f32.xlu0 %v895
  %v897 = vpop.xlane.xlu0 %896
  %v898 = vsel %vm775, %v876, -inf
  %899 = vmax.xlane.f32.xlu0 %v898
  %v900 = vpop.xlane.xlu0 %899
  %v901 = vsel %vm775, %v877, -inf
  %902 = vmax.xlane.f32.xlu0 %v901
  %v903 = vpop.xlane.xlu0 %902
  %v904 = vsel %vm775, %v878, -inf
  %905 = vmax.xlane.f32.xlu0 %v904
  %v906 = vpop.xlane.xlu0 %905
  %v907 = vsel %vm775, %v879, -inf
  %908 = vmax.xlane.f32.xlu0 %v907
  %v909 = vpop.xlane.xlu0 %908
  %v910 = vsel %vm775, %v880, -inf
  %911 = vmax.xlane.f32.xlu0 %v910
  %v912 = vpop.xlane.xlu0 %911
  %v913 = vsel %vm775, %v881, -inf
  %914 = vmax.xlane.f32.xlu0 %v913
  %v915 = vpop.xlane.xlu0 %914
  %v916 = vsel %vm775, %v882, -inf
  %917 = vmax.xlane.f32.xlu0 %v916
  %v918 = vpop.xlane.xlu0 %917
  %v919 = vsel %vm775, %v883, -inf
  %920 = vmax.xlane.f32.xlu0 %v919
  %v921 = vpop.xlane.xlu0 %920
  %v922 = vsel %vm775, %v884, -inf
  %923 = vmax.xlane.f32.xlu0 %v922
  %v924 = vpop.xlane.xlu0 %923
  %v925 = vsel %vm775, %v885, -inf
  %926 = vmax.xlane.f32.xlu0 %v925
  %v927 = vpop.xlane.xlu0 %926
  %v928 = vsel %vm775, %v886, -inf
  %929 = vmax.xlane.f32.xlu0 %v928
  %v930 = vpop.xlane.xlu0 %929
  %v931 = vsel %vm775, %v887, -inf
  %932 = vmax.xlane.f32.xlu0 %v931
  %v933 = vpop.xlane.xlu0 %932
  %v934 = vsel %vm775, %v888, -inf
  %935 = vmax.xlane.f32.xlu0 %v934
  %v936 = vpop.xlane.xlu0 %935
  %v937 = vsub.f32 %v873, %v891
  %v938 = vsub.f32 %v874, %v894
  %v939 = vsub.f32 %v875, %v897
  %v940 = vsub.f32 %v876, %v900
  %v941 = vsub.f32 %v877, %v903
  %v942 = vsub.f32 %v878, %v906
  %v943 = vsub.f32 %v879, %v909
  %v944 = vsub.f32 %v880, %v912
  %v945 = vsub.f32 %v881, %v915
  %v946 = vsub.f32 %v882, %v918
  %v947 = vsub.f32 %v883, %v921
  %v948 = vsub.f32 %v884, %v924
  %v949 = vsub.f32 %v885, %v927
  %v950 = vsub.f32 %v886, %v930
  %v951 = vsub.f32 %v887, %v933
  %v952 = vsub.f32 %v888, %v936
  %v953 = vmul.f32 %v937, 1.442695
  %v954 = vpow.pop %v953
  %v955 = vmul.f32 %v938, 1.442695
  %v956 = vpow.pop %v955
  %v957 = vmul.f32 %v939, 1.442695
  %v958 = vpow.pop %v957
  %v959 = vmul.f32 %v940, 1.442695
  %v960 = vpow.pop %v959
  %v961 = vmul.f32 %v941, 1.442695
  %v962 = vpow.pop %v961
  %v963 = vmul.f32 %v942, 1.442695
  %v964 = vpow.pop %v963
  %v965 = vmul.f32 %v943, 1.442695
  %v966 = vpow.pop %v965
  %v967 = vmul.f32 %v944, 1.442695
  %v968 = vpow.pop %v967
  %v969 = vmul.f32 %v945, 1.442695
  %v970 = vpow.pop %v969
  %v971 = vmul.f32 %v946, 1.442695
  %v972 = vpow.pop %v971
  %v973 = vmul.f32 %v947, 1.442695
  %v974 = vpow.pop %v973
  %v975 = vmul.f32 %v948, 1.442695
  %v976 = vpow.pop %v975
  %v977 = vmul.f32 %v949, 1.442695
  %v978 = vpow.pop %v977
  %v979 = vmul.f32 %v950, 1.442695
  %v980 = vpow.pop %v979
  %v981 = vmul.f32 %v951, 1.442695
  %v982 = vpow.pop %v981
  %v983 = vmul.f32 %v952, 1.442695
  %v984 = vpow.pop %v983
  %v985 = vsel %vm775, %v954, 0.0
  %986 = vadd.xlane.f32.xlu0 %v985
  %v987 = vpop.xlane.xlu0 %986
  %v988 = vsel %vm775, %v956, 0.0
  %989 = vadd.xlane.f32.xlu0 %v988
  %v990 = vpop.xlane.xlu0 %989
  %v991 = vsel %vm775, %v958, 0.0
  %992 = vadd.xlane.f32.xlu0 %v991
  %v993 = vpop.xlane.xlu0 %992
  %v994 = vsel %vm775, %v960, 0.0
  %995 = vadd.xlane.f32.xlu0 %v994
  %v996 = vpop.xlane.xlu0 %995
  %v997 = vsel %vm775, %v962, 0.0
  %998 = vadd.xlane.f32.xlu0 %v997
  %v999 = vpop.xlane.xlu0 %998
  %v1000 = vsel %vm775, %v964, 0.0
  %1001 = vadd.xlane.f32.xlu0 %v1000
  %v1002 = vpop.xlane.xlu0 %1001
  %v1003 = vsel %vm775, %v966, 0.0
  %1004 = vadd.xlane.f32.xlu0 %v1003
  %v1005 = vpop.xlane.xlu0 %1004
  %v1006 = vsel %vm775, %v968, 0.0
  %1007 = vadd.xlane.f32.xlu0 %v1006
  %v1008 = vpop.xlane.xlu0 %1007
  %v1009 = vsel %vm775, %v970, 0.0
  %1010 = vadd.xlane.f32.xlu0 %v1009
  %v1011 = vpop.xlane.xlu0 %1010
  %v1012 = vsel %vm775, %v972, 0.0
  %1013 = vadd.xlane.f32.xlu0 %v1012
  %v1014 = vpop.xlane.xlu0 %1013
  %v1015 = vsel %vm775, %v974, 0.0
  %1016 = vadd.xlane.f32.xlu0 %v1015
  %v1017 = vpop.xlane.xlu0 %1016
  %v1018 = vsel %vm775, %v976, 0.0
  %1019 = vadd.xlane.f32.xlu0 %v1018
  %v1020 = vpop.xlane.xlu0 %1019
  %v1021 = vsel %vm775, %v978, 0.0
  %1022 = vadd.xlane.f32.xlu0 %v1021
  %v1023 = vpop.xlane.xlu0 %1022
  %v1024 = vsel %vm775, %v980, 0.0
  %1025 = vadd.xlane.f32.xlu0 %v1024
  %v1026 = vpop.xlane.xlu0 %1025
  %v1027 = vsel %vm775, %v982, 0.0
  %1028 = vadd.xlane.f32.xlu0 %v1027
  %v1029 = vpop.xlane.xlu0 %1028
  %v1030 = vsel %vm775, %v984, 0.0
  %1031 = vadd.xlane.f32.xlu0 %v1030
  %v1032 = vpop.xlane.xlu0 %1031
  %v1033 = vrcp.pop %v987
  %v1034 = vrcp.pop %v990
  %v1035 = vrcp.pop %v993
  %v1036 = vrcp.pop %v996
  %v1037 = vrcp.pop %v999
  %v1038 = vrcp.pop %v1002
  %v1039 = vrcp.pop %v1005
  %v1040 = vrcp.pop %v1008
  %v1041 = vrcp.pop %v1011
  %v1042 = vrcp.pop %v1014
  %v1043 = vrcp.pop %v1017
  %v1044 = vrcp.pop %v1020
  %v1045 = vrcp.pop %v1023
  %v1046 = vrcp.pop %v1026
  %v1047 = vrcp.pop %v1029
  %v1048 = vrcp.pop %v1032
  %v1049 = vmul.f32 %v954, %v1033
  %v1050 = vmul.f32 %v956, %v1034
  %v1051 = vmul.f32 %v958, %v1035
  %v1052 = vmul.f32 %v960, %v1036
  %v1053 = vmul.f32 %v962, %v1037
  %v1054 = vmul.f32 %v964, %v1038
  %v1055 = vmul.f32 %v966, %v1039
  %v1056 = vmul.f32 %v968, %v1040
  %v1057 = vmul.f32 %v970, %v1041
  %v1058 = vmul.f32 %v972, %v1042
  %v1059 = vmul.f32 %v974, %v1043
  %v1060 = vmul.f32 %v976, %v1044
  %v1061 = vmul.f32 %v978, %v1045
  %v1062 = vmul.f32 %v980, %v1046
  %v1063 = vmul.f32 %v982, %v1047
  %v1064 = vmul.f32 %v984, %v1048
  %v1066 = vsel %vm775, %v1049, 0
  %v1069 = vsel %vm775, %v1050, 0
  %1071 = vmatprep.subr.mxu0 0.0
  %1072 = vmatpush1.msra.mxu0 %v46
  %1073 = vmatprep.subr.mxu0 0.0
  %1074 = vmatpush1.msra.mxu0 %v47
  %1075 = vmatprep.subr.mxu0 0.0
  %1076 = vmatpush1.msra.mxu0 0.0
  %1077 = vmatprep.subr.mxu0 0.0
  %1078 = vmatpush1.msra.mxu0 0.0
  %1079 = vmatprep.subr.mxu0 0.0
  %1080 = vmatpush1.msra.mxu0 0.0
  %1081 = vmatprep.subr.mxu0 0.0
  %1082 = vmatpush1.msra.mxu0 0.0
  %1083 = vmatprep.subr.mxu0 0.0
  %1084 = vmatpush1.msra.mxu0 0.0
  %1085 = vmatprep.subr.mxu0 0.0
  %1086 = vmatpush1.msra.mxu0 0.0
  %1087 = vmatprep.subr.mxu0 0.0
  %1088 = vmatpush1.msra.mxu0 0.0
  %1089 = vmatprep.subr.mxu0 0.0
  %1090 = vmatpush1.msra.mxu0 0.0
  %1091 = vmatprep.subr.mxu0 0.0
  %1092 = vmatpush1.msra.mxu0 0.0
  %1093 = vmatprep.subr.mxu0 0.0
  %1094 = vmatpush1.msra.mxu0 0.0
  %1095 = vmatprep.subr.mxu0 0.0
  %1096 = vmatpush1.msra.mxu0 0.0
  %1097 = vmatprep.subr.mxu0 0.0
  %1098 = vmatpush1.msra.mxu0 0.0
  %1099 = vmatprep.subr.mxu0 0.0
  %1100 = vmatpush1.msra.mxu0 0.0
  %1101 = vmatprep.subr.mxu0 0.0
  %1102 = vmatpush1.msra.mxu0 0.0
  %1103 = vmatprep.subr.mxu0 0.0
  %1104 = vmatpush1.msra.mxu0 0.0
  %1105 = vmatprep.subr.mxu0 0.0
  %1106 = vmatpush1.msra.mxu0 0.0
  %1107 = vmatprep.subr.mxu0 0.0
  %1108 = vmatpush1.msra.mxu0 0.0
  %1109 = vmatprep.subr.mxu0 0.0
  %1110 = vmatpush1.msra.mxu0 0.0
  %1111 = vmatprep.subr.mxu0 0.0
  %1112 = vmatpush1.msra.mxu0 0.0
  %1113 = vmatprep.subr.mxu0 0.0
  %1114 = vmatpush1.msra.mxu0 0.0
  %1115 = vmatprep.subr.mxu0 0.0
  %1116 = vmatpush1.msra.mxu0 0.0
  %1117 = vmatprep.subr.mxu0 0.0
  %1118 = vmatpush1.msra.mxu0 0.0
  %1119 = vmatprep.subr.mxu0 0.0
  %1120 = vmatpush1.msra.mxu0 0.0
  %1121 = vmatprep.subr.mxu0 0.0
  %1122 = vmatpush1.msra.mxu0 0.0
  %1123 = vmatprep.subr.mxu0 0.0
  %1124 = vmatpush1.msra.mxu0 0.0
  %1125 = vmatprep.subr.mxu0 0.0
  %1126 = vmatpush1.msra.mxu0 0.0
  %1127 = vmatprep.subr.mxu0 0.0
  %1128 = vmatpush1.msra.mxu0 0.0
  %1129 = vmatprep.subr.mxu0 0.0
  %1130 = vmatpush1.msra.mxu0 0.0
  %1131 = vmatprep.subr.mxu0 0.0
  %1132 = vmatpush1.msra.mxu0 0.0
  %1133 = vmatprep.subr.mxu0 0.0
  %1134 = vmatpush1.msra.mxu0 0.0
  %1135 = vmatprep.mubr.f32.mxu0 0.0
  %1136 = vmatmul.mubr.f32.gmra.mrb[0].mxu0 %v1066
  %v1137 = vpop.f32.mrb[0].mxu0
  %v1138 = vadd.f32 0.0, %v1137
  %v1139 = vpop.f32.mrb[0].mxu0
  %1140 = vmatprep.mubr.f32.mxu0 0.0
  %1141 = vmatmul.mubr.f32.gmra.mrb[0].mxu0 %v1069
  %v1142 = vpop.f32.mrb[0].mxu0
  %v1143 = vadd.f32 0.0, %v1142
  %v1144 = vpop.f32.mrb[0].mxu0
  %1145 = vdwg.mxu0
  %v1147 = vsel %vm775, %v1051, 0
  %v1150 = vsel %vm775, %v1052, 0
  %1152 = vmatprep.subr.mxu0 0.0
  %1153 = vmatpush1.msra.mxu0 %v48
  %1154 = vmatprep.subr.mxu0 0.0
  %1155 = vmatpush1.msra.mxu0 %v49
  %1156 = vmatprep.subr.mxu0 0.0
  %1157 = vmatpush1.msra.mxu0 0.0
  %1158 = vmatprep.subr.mxu0 0.0
  %1159 = vmatpush1.msra.mxu0 0.0
  %1160 = vmatprep.subr.mxu0 0.0
  %1161 = vmatpush1.msra.mxu0 0.0
  %1162 = vmatprep.subr.mxu0 0.0
  %1163 = vmatpush1.msra.mxu0 0.0
  %1164 = vmatprep.subr.mxu0 0.0
  %1165 = vmatpush1.msra.mxu0 0.0
  %1166 = vmatprep.subr.mxu0 0.0
  %1167 = vmatpush1.msra.mxu0 0.0
  %1168 = vmatprep.subr.mxu0 0.0
  %1169 = vmatpush1.msra.mxu0 0.0
  %1170 = vmatprep.subr.mxu0 0.0
  %1171 = vmatpush1.msra.mxu0 0.0
  %1172 = vmatprep.subr.mxu0 0.0
  %1173 = vmatpush1.msra.mxu0 0.0
  %1174 = vmatprep.subr.mxu0 0.0
  %1175 = vmatpush1.msra.mxu0 0.0
  %1176 = vmatprep.subr.mxu0 0.0
  %1177 = vmatpush1.msra.mxu0 0.0
  %1178 = vmatprep.subr.mxu0 0.0
  %1179 = vmatpush1.msra.mxu0 0.0
  %1180 = vmatprep.subr.mxu0 0.0
  %1181 = vmatpush1.msra.mxu0 0.0
  %1182 = vmatprep.subr.mxu0 0.0
  %1183 = vmatpush1.msra.mxu0 0.0
  %1184 = vmatprep.subr.mxu0 0.0
  %1185 = vmatpush1.msra.mxu0 0.0
  %1186 = vmatprep.subr.mxu0 0.0
  %1187 = vmatpush1.msra.mxu0 0.0
  %1188 = vmatprep.subr.mxu0 0.0
  %1189 = vmatpush1.msra.mxu0 0.0
  %1190 = vmatprep.subr.mxu0 0.0
  %1191 = vmatpush1.msra.mxu0 0.0
  %1192 = vmatprep.subr.mxu0 0.0
  %1193 = vmatpush1.msra.mxu0 0.0
  %1194 = vmatprep.subr.mxu0 0.0
  %1195 = vmatpush1.msra.mxu0 0.0
  %1196 = vmatprep.subr.mxu0 0.0
  %1197 = vmatpush1.msra.mxu0 0.0
  %1198 = vmatprep.subr.mxu0 0.0
  %1199 = vmatpush1.msra.mxu0 0.0
  %1200 = vmatprep.subr.mxu0 0.0
  %1201 = vmatpush1.msra.mxu0 0.0
  %1202 = vmatprep.subr.mxu0 0.0
  %1203 = vmatpush1.msra.mxu0 0.0
  %1204 = vmatprep.subr.mxu0 0.0
  %1205 = vmatpush1.msra.mxu0 0.0
  %1206 = vmatprep.subr.mxu0 0.0
  %1207 = vmatpush1.msra.mxu0 0.0
  %1208 = vmatprep.subr.mxu0 0.0
  %1209 = vmatpush1.msra.mxu0 0.0
  %1210 = vmatprep.subr.mxu0 0.0
  %1211 = vmatpush1.msra.mxu0 0.0
  %1212 = vmatprep.subr.mxu0 0.0
  %1213 = vmatpush1.msra.mxu0 0.0
  %1214 = vmatprep.subr.mxu0 0.0
  %1215 = vmatpush1.msra.mxu0 0.0
  %1216 = vmatprep.mubr.f32.mxu0 0.0
  %1217 = vmatmul.mubr.f32.gmra.mrb[0].mxu0 %v1147
  %v1218 = vpop.f32.mrb[0].mxu0
  %v1219 = vadd.f32 0.0, %v1218
  %v1220 = vpop.f32.mrb[0].mxu0
  %1221 = vmatprep.mubr.f32.mxu0 0.0
  %1222 = vmatmul.mubr.f32.gmra.mrb[0].mxu0 %v1150
  %v1223 = vpop.f32.mrb[0].mxu0
  %v1224 = vadd.f32 0.0, %v1223
  %v1225 = vpop.f32.mrb[0].mxu0
  %1226 = vdwg.mxu0
  %v1228 = vsel %vm775, %v1053, 0
  %v1231 = vsel %vm775, %v1054, 0
  %1233 = vmatprep.subr.mxu0 0.0
  %1234 = vmatpush1.msra.mxu0 %v50
  %1235 = vmatprep.subr.mxu0 0.0
  %1236 = vmatpush1.msra.mxu0 %v51
  %1237 = vmatprep.subr.mxu0 0.0
  %1238 = vmatpush1.msra.mxu0 0.0
  %1239 = vmatprep.subr.mxu0 0.0
  %1240 = vmatpush1.msra.mxu0 0.0
  %1241 = vmatprep.subr.mxu0 0.0
  %1242 = vmatpush1.msra.mxu0 0.0
  %1243 = vmatprep.subr.mxu0 0.0
  %1244 = vmatpush1.msra.mxu0 0.0
  %1245 = vmatprep.subr.mxu0 0.0
  %1246 = vmatpush1.msra.mxu0 0.0
  %1247 = vmatprep.subr.mxu0 0.0
  %1248 = vmatpush1.msra.mxu0 0.0
  %1249 = vmatprep.subr.mxu0 0.0
  %1250 = vmatpush1.msra.mxu0 0.0
  %1251 = vmatprep.subr.mxu0 0.0
  %1252 = vmatpush1.msra.mxu0 0.0
  %1253 = vmatprep.subr.mxu0 0.0
  %1254 = vmatpush1.msra.mxu0 0.0
  %1255 = vmatprep.subr.mxu0 0.0
  %1256 = vmatpush1.msra.mxu0 0.0
  %1257 = vmatprep.subr.mxu0 0.0
  %1258 = vmatpush1.msra.mxu0 0.0
  %1259 = vmatprep.subr.mxu0 0.0
  %1260 = vmatpush1.msra.mxu0 0.0
  %1261 = vmatprep.subr.mxu0 0.0
  %1262 = vmatpush1.msra.mxu0 0.0
  %1263 = vmatprep.subr.mxu0 0.0
  %1264 = vmatpush1.msra.mxu0 0.0
  %1265 = vmatprep.subr.mxu0 0.0
  %1266 = vmatpush1.msra.mxu0 0.0
  %1267 = vmatprep.subr.mxu0 0.0
  %1268 = vmatpush1.msra.mxu0 0.0
  %1269 = vmatprep.subr.mxu0 0.0
  %1270 = vmatpush1.msra.mxu0 0.0
  %1271 = vmatprep.subr.mxu0 0.0
  %1272 = vmatpush1.msra.mxu0 0.0
  %1273 = vmatprep.subr.mxu0 0.0
  %1274 = vmatpush1.msra.mxu0 0.0
  %1275 = vmatprep.subr.mxu0 0.0
  %1276 = vmatpush1.msra.mxu0 0.0
  %1277 = vmatprep.subr.mxu0 0.0
  %1278 = vmatpush1.msra.mxu0 0.0
  %1279 = vmatprep.subr.mxu0 0.0
  %1280 = vmatpush1.msra.mxu0 0.0
  %1281 = vmatprep.subr.mxu0 0.0
  %1282 = vmatpush1.msra.mxu0 0.0
  %1283 = vmatprep.subr.mxu0 0.0
  %1284 = vmatpush1.msra.mxu0 0.0
  %1285 = vmatprep.subr.mxu0 0.0
  %1286 = vmatpush1.msra.mxu0 0.0
  %1287 = vmatprep.subr.mxu0 0.0
  %1288 = vmatpush1.msra.mxu0 0.0
  %1289 = vmatprep.subr.mxu0 0.0
  %1290 = vmatpush1.msra.mxu0 0.0
  %1291 = vmatprep.subr.mxu0 0.0
  %1292 = vmatpush1.msra.mxu0 0.0
  %1293 = vmatprep.subr.mxu0 0.0
  %1294 = vmatpush1.msra.mxu0 0.0
  %1295 = vmatprep.subr.mxu0 0.0
  %1296 = vmatpush1.msra.mxu0 0.0
  %1297 = vmatprep.mubr.f32.mxu0 0.0
  %1298 = vmatmul.mubr.f32.gmra.mrb[0].mxu0 %v1228
  %v1299 = vpop.f32.mrb[0].mxu0
  %v1300 = vadd.f32 0.0, %v1299
  %v1301 = vpop.f32.mrb[0].mxu0
  %1302 = vmatprep.mubr.f32.mxu0 0.0
  %1303 = vmatmul.mubr.f32.gmra.mrb[0].mxu0 %v1231
  %v1304 = vpop.f32.mrb[0].mxu0
  %v1305 = vadd.f32 0.0, %v1304
  %v1306 = vpop.f32.mrb[0].mxu0
  %1307 = vdwg.mxu0
  %v1309 = vsel %vm775, %v1055, 0
  %v1312 = vsel %vm775, %v1056, 0
  %1314 = vmatprep.subr.mxu0 0.0
  %1315 = vmatpush1.msra.mxu0 %v52
  %1316 = vmatprep.subr.mxu0 0.0
  %1317 = vmatpush1.msra.mxu0 %v53
  %1318 = vmatprep.subr.mxu0 0.0
  %1319 = vmatpush1.msra.mxu0 0.0
  %1320 = vmatprep.subr.mxu0 0.0
  %1321 = vmatpush1.msra.mxu0 0.0
  %1322 = vmatprep.subr.mxu0 0.0
  %1323 = vmatpush1.msra.mxu0 0.0
  %1324 = vmatprep.subr.mxu0 0.0
  %1325 = vmatpush1.msra.mxu0 0.0
  %1326 = vmatprep.subr.mxu0 0.0
  %1327 = vmatpush1.msra.mxu0 0.0
  %1328 = vmatprep.subr.mxu0 0.0
  %1329 = vmatpush1.msra.mxu0 0.0
  %1330 = vmatprep.subr.mxu0 0.0
  %1331 = vmatpush1.msra.mxu0 0.0
  %1332 = vmatprep.subr.mxu0 0.0
  %1333 = vmatpush1.msra.mxu0 0.0
  %1334 = vmatprep.subr.mxu0 0.0
  %1335 = vmatpush1.msra.mxu0 0.0
  %1336 = vmatprep.subr.mxu0 0.0
  %1337 = vmatpush1.msra.mxu0 0.0
  %1338 = vmatprep.subr.mxu0 0.0
  %1339 = vmatpush1.msra.mxu0 0.0
  %1340 = vmatprep.subr.mxu0 0.0
  %1341 = vmatpush1.msra.mxu0 0.0
  %1342 = vmatprep.subr.mxu0 0.0
  %1343 = vmatpush1.msra.mxu0 0.0
  %1344 = vmatprep.subr.mxu0 0.0
  %1345 = vmatpush1.msra.mxu0 0.0
  %1346 = vmatprep.subr.mxu0 0.0
  %1347 = vmatpush1.msra.mxu0 0.0
  %1348 = vmatprep.subr.mxu0 0.0
  %1349 = vmatpush1.msra.mxu0 0.0
  %1350 = vmatprep.subr.mxu0 0.0
  %1351 = vmatpush1.msra.mxu0 0.0
  %1352 = vmatprep.subr.mxu0 0.0
  %1353 = vmatpush1.msra.mxu0 0.0
  %1354 = vmatprep.subr.mxu0 0.0
  %1355 = vmatpush1.msra.mxu0 0.0
  %1356 = vmatprep.subr.mxu0 0.0
  %1357 = vmatpush1.msra.mxu0 0.0
  %1358 = vmatprep.subr.mxu0 0.0
  %1359 = vmatpush1.msra.mxu0 0.0
  %1360 = vmatprep.subr.mxu0 0.0
  %1361 = vmatpush1.msra.mxu0 0.0
  %1362 = vmatprep.subr.mxu0 0.0
  %1363 = vmatpush1.msra.mxu0 0.0
  %1364 = vmatprep.subr.mxu0 0.0
  %1365 = vmatpush1.msra.mxu0 0.0
  %1366 = vmatprep.subr.mxu0 0.0
  %1367 = vmatpush1.msra.mxu0 0.0
  %1368 = vmatprep.subr.mxu0 0.0
  %1369 = vmatpush1.msra.mxu0 0.0
  %1370 = vmatprep.subr.mxu0 0.0
  %1371 = vmatpush1.msra.mxu0 0.0
  %1372 = vmatprep.subr.mxu0 0.0
  %1373 = vmatpush1.msra.mxu0 0.0
  %1374 = vmatprep.subr.mxu0 0.0
  %1375 = vmatpush1.msra.mxu0 0.0
  %1376 = vmatprep.subr.mxu0 0.0
  %1377 = vmatpush1.msra.mxu0 0.0
  %1378 = vmatprep.mubr.f32.mxu0 0.0
  %1379 = vmatmul.mubr.f32.gmra.mrb[0].mxu0 %v1309
  %v1380 = vpop.f32.mrb[0].mxu0
  %v1381 = vadd.f32 0.0, %v1380
  %v1382 = vpop.f32.mrb[0].mxu0
  %1383 = vmatprep.mubr.f32.mxu0 0.0
  %1384 = vmatmul.mubr.f32.gmra.mrb[0].mxu0 %v1312
  %v1385 = vpop.f32.mrb[0].mxu0
  %v1386 = vadd.f32 0.0, %v1385
  %v1387 = vpop.f32.mrb[0].mxu0
  %1388 = vdwg.mxu0
  %v1390 = vsel %vm775, %v1057, 0
  %v1393 = vsel %vm775, %v1058, 0
  %1395 = vmatprep.subr.mxu0 0.0
  %1396 = vmatpush1.msra.mxu0 %v54
  %1397 = vmatprep.subr.mxu0 0.0
  %1398 = vmatpush1.msra.mxu0 %v55
  %1399 = vmatprep.subr.mxu0 0.0
  %1400 = vmatpush1.msra.mxu0 0.0
  %1401 = vmatprep.subr.mxu0 0.0
  %1402 = vmatpush1.msra.mxu0 0.0
  %1403 = vmatprep.subr.mxu0 0.0
  %1404 = vmatpush1.msra.mxu0 0.0
  %1405 = vmatprep.subr.mxu0 0.0
  %1406 = vmatpush1.msra.mxu0 0.0
  %1407 = vmatprep.subr.mxu0 0.0
  %1408 = vmatpush1.msra.mxu0 0.0
  %1409 = vmatprep.subr.mxu0 0.0
  %1410 = vmatpush1.msra.mxu0 0.0
  %1411 = vmatprep.subr.mxu0 0.0
  %1412 = vmatpush1.msra.mxu0 0.0
  %1413 = vmatprep.subr.mxu0 0.0
  %1414 = vmatpush1.msra.mxu0 0.0
  %1415 = vmatprep.subr.mxu0 0.0
  %1416 = vmatpush1.msra.mxu0 0.0
  %1417 = vmatprep.subr.mxu0 0.0
  %1418 = vmatpush1.msra.mxu0 0.0
  %1419 = vmatprep.subr.mxu0 0.0
  %1420 = vmatpush1.msra.mxu0 0.0
  %1421 = vmatprep.subr.mxu0 0.0
  %1422 = vmatpush1.msra.mxu0 0.0
  %1423 = vmatprep.subr.mxu0 0.0
  %1424 = vmatpush1.msra.mxu0 0.0
  %1425 = vmatprep.subr.mxu0 0.0
  %1426 = vmatpush1.msra.mxu0 0.0
  %1427 = vmatprep.subr.mxu0 0.0
  %1428 = vmatpush1.msra.mxu0 0.0
  %1429 = vmatprep.subr.mxu0 0.0
  %1430 = vmatpush1.msra.mxu0 0.0
  %1431 = vmatprep.subr.mxu0 0.0
  %1432 = vmatpush1.msra.mxu0 0.0
  %1433 = vmatprep.subr.mxu0 0.0
  %1434 = vmatpush1.msra.mxu0 0.0
  %1435 = vmatprep.subr.mxu0 0.0
  %1436 = vmatpush1.msra.mxu0 0.0
  %1437 = vmatprep.subr.mxu0 0.0
  %1438 = vmatpush1.msra.mxu0 0.0
  %1439 = vmatprep.subr.mxu0 0.0
  %1440 = vmatpush1.msra.mxu0 0.0
  %1441 = vmatprep.subr.mxu0 0.0
  %1442 = vmatpush1.msra.mxu0 0.0
  %1443 = vmatprep.subr.mxu0 0.0
  %1444 = vmatpush1.msra.mxu0 0.0
  %1445 = vmatprep.subr.mxu0 0.0
  %1446 = vmatpush1.msra.mxu0 0.0
  %1447 = vmatprep.subr.mxu0 0.0
  %1448 = vmatpush1.msra.mxu0 0.0
  %1449 = vmatprep.subr.mxu0 0.0
  %1450 = vmatpush1.msra.mxu0 0.0
  %1451 = vmatprep.subr.mxu0 0.0
  %1452 = vmatpush1.msra.mxu0 0.0
  %1453 = vmatprep.subr.mxu0 0.0
  %1454 = vmatpush1.msra.mxu0 0.0
  %1455 = vmatprep.subr.mxu0 0.0
  %1456 = vmatpush1.msra.mxu0 0.0
  %1457 = vmatprep.subr.mxu0 0.0
  %1458 = vmatpush1.msra.mxu0 0.0
  %1459 = vmatprep.mubr.f32.mxu0 0.0
  %1460 = vmatmul.mubr.f32.gmra.mrb[0].mxu0 %v1390
  %v1461 = vpop.f32.mrb[0].mxu0
  %v1462 = vadd.f32 0.0, %v1461
  %v1463 = vpop.f32.mrb[0].mxu0
  %1464 = vmatprep.mubr.f32.mxu0 0.0
  %1465 = vmatmul.mubr.f32.gmra.mrb[0].mxu0 %v1393
  %v1466 = vpop.f32.mrb[0].mxu0
  %v1467 = vadd.f32 0.0, %v1466
  %v1468 = vpop.f32.mrb[0].mxu0
  %1469 = vdwg.mxu0
  %v1471 = vsel %vm775, %v1059, 0
  %v1474 = vsel %vm775, %v1060, 0
  %1476 = vmatprep.subr.mxu0 0.0
  %1477 = vmatpush1.msra.mxu0 %v56
  %1478 = vmatprep.subr.mxu0 0.0
  %1479 = vmatpush1.msra.mxu0 %v57
  %1480 = vmatprep.subr.mxu0 0.0
  %1481 = vmatpush1.msra.mxu0 0.0
  %1482 = vmatprep.subr.mxu0 0.0
  %1483 = vmatpush1.msra.mxu0 0.0
  %1484 = vmatprep.subr.mxu0 0.0
  %1485 = vmatpush1.msra.mxu0 0.0
  %1486 = vmatprep.subr.mxu0 0.0
  %1487 = vmatpush1.msra.mxu0 0.0
  %1488 = vmatprep.subr.mxu0 0.0
  %1489 = vmatpush1.msra.mxu0 0.0
  %1490 = vmatprep.subr.mxu0 0.0
  %1491 = vmatpush1.msra.mxu0 0.0
  %1492 = vmatprep.subr.mxu0 0.0
  %1493 = vmatpush1.msra.mxu0 0.0
  %1494 = vmatprep.subr.mxu0 0.0
  %1495 = vmatpush1.msra.mxu0 0.0
  %1496 = vmatprep.subr.mxu0 0.0
  %1497 = vmatpush1.msra.mxu0 0.0
  %1498 = vmatprep.subr.mxu0 0.0
  %1499 = vmatpush1.msra.mxu0 0.0
  %1500 = vmatprep.subr.mxu0 0.0
  %1501 = vmatpush1.msra.mxu0 0.0
  %1502 = vmatprep.subr.mxu0 0.0
  %1503 = vmatpush1.msra.mxu0 0.0
  %1504 = vmatprep.subr.mxu0 0.0
  %1505 = vmatpush1.msra.mxu0 0.0
  %1506 = vmatprep.subr.mxu0 0.0
  %1507 = vmatpush1.msra.mxu0 0.0
  %1508 = vmatprep.subr.mxu0 0.0
  %1509 = vmatpush1.msra.mxu0 0.0
  %1510 = vmatprep.subr.mxu0 0.0
  %1511 = vmatpush1.msra.mxu0 0.0
  %1512 = vmatprep.subr.mxu0 0.0
  %1513 = vmatpush1.msra.mxu0 0.0
  %1514 = vmatprep.subr.mxu0 0.0
  %1515 = vmatpush1.msra.mxu0 0.0
  %1516 = vmatprep.subr.mxu0 0.0
  %1517 = vmatpush1.msra.mxu0 0.0
  %1518 = vmatprep.subr.mxu0 0.0
  %1519 = vmatpush1.msra.mxu0 0.0
  %1520 = vmatprep.subr.mxu0 0.0
  %1521 = vmatpush1.msra.mxu0 0.0
  %1522 = vmatprep.subr.mxu0 0.0
  %1523 = vmatpush1.msra.mxu0 0.0
  %1524 = vmatprep.subr.mxu0 0.0
  %1525 = vmatpush1.msra.mxu0 0.0
  %1526 = vmatprep.subr.mxu0 0.0
  %1527 = vmatpush1.msra.mxu0 0.0
  %1528 = vmatprep.subr.mxu0 0.0
  %1529 = vmatpush1.msra.mxu0 0.0
  %1530 = vmatprep.subr.mxu0 0.0
  %1531 = vmatpush1.msra.mxu0 0.0
  %1532 = vmatprep.subr.mxu0 0.0
  %1533 = vmatpush1.msra.mxu0 0.0
  %1534 = vmatprep.subr.mxu0 0.0
  %1535 = vmatpush1.msra.mxu0 0.0
  %1536 = vmatprep.subr.mxu0 0.0
  %1537 = vmatpush1.msra.mxu0 0.0
  %1538 = vmatprep.subr.mxu0 0.0
  %1539 = vmatpush1.msra.mxu0 0.0
  %1540 = vmatprep.mubr.f32.mxu0 0.0
  %1541 = vmatmul.mubr.f32.gmra.mrb[0].mxu0 %v1471
  %v1542 = vpop.f32.mrb[0].mxu0
  %v1543 = vadd.f32 0.0, %v1542
  %v1544 = vpop.f32.mrb[0].mxu0
  %1545 = vmatprep.mubr.f32.mxu0 0.0
  %1546 = vmatmul.mubr.f32.gmra.mrb[0].mxu0 %v1474
  %v1547 = vpop.f32.mrb[0].mxu0
  %v1548 = vadd.f32 0.0, %v1547
  %v1549 = vpop.f32.mrb[0].mxu0
  %1550 = vdwg.mxu0
  %v1552 = vsel %vm775, %v1061, 0
  %v1555 = vsel %vm775, %v1062, 0
  %1557 = vmatprep.subr.mxu0 0.0
  %1558 = vmatpush1.msra.mxu0 %v58
  %1559 = vmatprep.subr.mxu0 0.0
  %1560 = vmatpush1.msra.mxu0 %v59
  %1561 = vmatprep.subr.mxu0 0.0
  %1562 = vmatpush1.msra.mxu0 0.0
  %1563 = vmatprep.subr.mxu0 0.0
  %1564 = vmatpush1.msra.mxu0 0.0
  %1565 = vmatprep.subr.mxu0 0.0
  %1566 = vmatpush1.msra.mxu0 0.0
  %1567 = vmatprep.subr.mxu0 0.0
  %1568 = vmatpush1.msra.mxu0 0.0
  %1569 = vmatprep.subr.mxu0 0.0
  %1570 = vmatpush1.msra.mxu0 0.0
  %1571 = vmatprep.subr.mxu0 0.0
  %1572 = vmatpush1.msra.mxu0 0.0
  %1573 = vmatprep.subr.mxu0 0.0
  %1574 = vmatpush1.msra.mxu0 0.0
  %1575 = vmatprep.subr.mxu0 0.0
  %1576 = vmatpush1.msra.mxu0 0.0
  %1577 = vmatprep.subr.mxu0 0.0
  %1578 = vmatpush1.msra.mxu0 0.0
  %1579 = vmatprep.subr.mxu0 0.0
  %1580 = vmatpush1.msra.mxu0 0.0
  %1581 = vmatprep.subr.mxu0 0.0
  %1582 = vmatpush1.msra.mxu0 0.0
  %1583 = vmatprep.subr.mxu0 0.0
  %1584 = vmatpush1.msra.mxu0 0.0
  %1585 = vmatprep.subr.mxu0 0.0
  %1586 = vmatpush1.msra.mxu0 0.0
  %1587 = vmatprep.subr.mxu0 0.0
  %1588 = vmatpush1.msra.mxu0 0.0
  %1589 = vmatprep.subr.mxu0 0.0
  %1590 = vmatpush1.msra.mxu0 0.0
  %1591 = vmatprep.subr.mxu0 0.0
  %1592 = vmatpush1.msra.mxu0 0.0
  %1593 = vmatprep.subr.mxu0 0.0
  %1594 = vmatpush1.msra.mxu0 0.0
  %1595 = vmatprep.subr.mxu0 0.0
  %1596 = vmatpush1.msra.mxu0 0.0
  %1597 = vmatprep.subr.mxu0 0.0
  %1598 = vmatpush1.msra.mxu0 0.0
  %1599 = vmatprep.subr.mxu0 0.0
  %1600 = vmatpush1.msra.mxu0 0.0
  %1601 = vmatprep.subr.mxu0 0.0
  %1602 = vmatpush1.msra.mxu0 0.0
  %1603 = vmatprep.subr.mxu0 0.0
  %1604 = vmatpush1.msra.mxu0 0.0
  %1605 = vmatprep.subr.mxu0 0.0
  %1606 = vmatpush1.msra.mxu0 0.0
  %1607 = vmatprep.subr.mxu0 0.0
  %1608 = vmatpush1.msra.mxu0 0.0
  %1609 = vmatprep.subr.mxu0 0.0
  %1610 = vmatpush1.msra.mxu0 0.0
  %1611 = vmatprep.subr.mxu0 0.0
  %1612 = vmatpush1.msra.mxu0 0.0
  %1613 = vmatprep.subr.mxu0 0.0
  %1614 = vmatpush1.msra.mxu0 0.0
  %1615 = vmatprep.subr.mxu0 0.0
  %1616 = vmatpush1.msra.mxu0 0.0
  %1617 = vmatprep.subr.mxu0 0.0
  %1618 = vmatpush1.msra.mxu0 0.0
  %1619 = vmatprep.subr.mxu0 0.0
  %1620 = vmatpush1.msra.mxu0 0.0
  %1621 = vmatprep.mubr.f32.mxu0 0.0
  %1622 = vmatmul.mubr.f32.gmra.mrb[0].mxu0 %v1552
  %v1623 = vpop.f32.mrb[0].mxu0
  %v1624 = vadd.f32 0.0, %v1623
  %v1625 = vpop.f32.mrb[0].mxu0
  %1626 = vmatprep.mubr.f32.mxu0 0.0
  %1627 = vmatmul.mubr.f32.gmra.mrb[0].mxu0 %v1555
  %v1628 = vpop.f32.mrb[0].mxu0
  %v1629 = vadd.f32 0.0, %v1628
  %v1630 = vpop.f32.mrb[0].mxu0
  %1631 = vdwg.mxu0
  %v1633 = vsel %vm775, %v1063, 0
  %v1636 = vsel %vm775, %v1064, 0
  %1638 = vmatprep.subr.mxu0 0.0
  %1639 = vmatpush1.msra.mxu0 %v60
  %1640 = vmatprep.subr.mxu0 0.0
  %1641 = vmatpush1.msra.mxu0 %v61
  %1642 = vmatprep.subr.mxu0 0.0
  %1643 = vmatpush1.msra.mxu0 0.0
  %1644 = vmatprep.subr.mxu0 0.0
  %1645 = vmatpush1.msra.mxu0 0.0
  %1646 = vmatprep.subr.mxu0 0.0
  %1647 = vmatpush1.msra.mxu0 0.0
  %1648 = vmatprep.subr.mxu0 0.0
  %1649 = vmatpush1.msra.mxu0 0.0
  %1650 = vmatprep.subr.mxu0 0.0
  %1651 = vmatpush1.msra.mxu0 0.0
  %1652 = vmatprep.subr.mxu0 0.0
  %1653 = vmatpush1.msra.mxu0 0.0
  %1654 = vmatprep.subr.mxu0 0.0
  %1655 = vmatpush1.msra.mxu0 0.0
  %1656 = vmatprep.subr.mxu0 0.0
  %1657 = vmatpush1.msra.mxu0 0.0
  %1658 = vmatprep.subr.mxu0 0.0
  %1659 = vmatpush1.msra.mxu0 0.0
  %1660 = vmatprep.subr.mxu0 0.0
  %1661 = vmatpush1.msra.mxu0 0.0
  %1662 = vmatprep.subr.mxu0 0.0
  %1663 = vmatpush1.msra.mxu0 0.0
  %1664 = vmatprep.subr.mxu0 0.0
  %1665 = vmatpush1.msra.mxu0 0.0
  %1666 = vmatprep.subr.mxu0 0.0
  %1667 = vmatpush1.msra.mxu0 0.0
  %1668 = vmatprep.subr.mxu0 0.0
  %1669 = vmatpush1.msra.mxu0 0.0
  %1670 = vmatprep.subr.mxu0 0.0
  %1671 = vmatpush1.msra.mxu0 0.0
  %1672 = vmatprep.subr.mxu0 0.0
  %1673 = vmatpush1.msra.mxu0 0.0
  %1674 = vmatprep.subr.mxu0 0.0
  %1675 = vmatpush1.msra.mxu0 0.0
  %1676 = vmatprep.subr.mxu0 0.0
  %1677 = vmatpush1.msra.mxu0 0.0
  %1678 = vmatprep.subr.mxu0 0.0
  %1679 = vmatpush1.msra.mxu0 0.0
  %1680 = vmatprep.subr.mxu0 0.0
  %1681 = vmatpush1.msra.mxu0 0.0
  %1682 = vmatprep.subr.mxu0 0.0
  %1683 = vmatpush1.msra.mxu0 0.0
  %1684 = vmatprep.subr.mxu0 0.0
  %1685 = vmatpush1.msra.mxu0 0.0
  %1686 = vmatprep.subr.mxu0 0.0
  %1687 = vmatpush1.msra.mxu0 0.0
  %1688 = vmatprep.subr.mxu0 0.0
  %1689 = vmatpush1.msra.mxu0 0.0
  %1690 = vmatprep.subr.mxu0 0.0
  %1691 = vmatpush1.msra.mxu0 0.0
  %1692 = vmatprep.subr.mxu0 0.0
  %1693 = vmatpush1.msra.mxu0 0.0
  %1694 = vmatprep.subr.mxu0 0.0
  %1695 = vmatpush1.msra.mxu0 0.0
  %1696 = vmatprep.subr.mxu0 0.0
  %1697 = vmatpush1.msra.mxu0 0.0
  %1698 = vmatprep.subr.mxu0 0.0
  %1699 = vmatpush1.msra.mxu0 0.0
  %1700 = vmatprep.subr.mxu0 0.0
  %1701 = vmatpush1.msra.mxu0 0.0
  %1702 = vmatprep.mubr.f32.mxu0 0.0
  %1703 = vmatmul.mubr.f32.gmra.mrb[0].mxu0 %v1633
  %v1704 = vpop.f32.mrb[0].mxu0
  %v1705 = vadd.f32 0.0, %v1704
  %v1706 = vpop.f32.mrb[0].mxu0
  %1707 = vmatprep.mubr.f32.mxu0 0.0
  %1708 = vmatmul.mubr.f32.gmra.mrb[0].mxu0 %v1636
  %v1709 = vpop.f32.mrb[0].mxu0
  %v1710 = vadd.f32 0.0, %v1709
  %v1711 = vpop.f32.mrb[0].mxu0
  %1712 = vdwg.mxu0
  %1713 = vst.msk [vmem:[%s3] sm:$0xff] %vm62, %v1138
  %1714 = vst.msk [vmem:[%s3 + $0x8] sm:$0xff] %vm62, %v1143
  %1715 = vst.msk [vmem:[%s3 + $0x10] sm:$0xff] %vm62, %v1219
  %1716 = vst.msk [vmem:[%s3 + $0x18] sm:$0xff] %vm62, %v1224
  %1717 = vst.msk [vmem:[%s3 + $0x20] sm:$0xff] %vm62, %v1300
  %1718 = vst.msk [vmem:[%s3 + $0x28] sm:$0xff] %vm62, %v1305
  %1719 = vst.msk [vmem:[%s3 + $0x30] sm:$0xff] %vm62, %v1381
  %1720 = vst.msk [vmem:[%s3 + $0x38] sm:$0xff] %vm62, %v1386
  %1721 = vst.msk [vmem:[%s3 + $0x40] sm:$0xff] %vm62, %v1462
  %1722 = vst.msk [vmem:[%s3 + $0x48] sm:$0xff] %vm62, %v1467
  %1723 = vst.msk [vmem:[%s3 + $0x50] sm:$0xff] %vm62, %v1543
  %1724 = vst.msk [vmem:[%s3 + $0x58] sm:$0xff] %vm62, %v1548
  %1725 = vst.msk [vmem:[%s3 + $0x60] sm:$0xff] %vm62, %v1624
  %1726 = vst.msk [vmem:[%s3 + $0x68] sm:$0xff] %vm62, %v1629
  %1727 = vst.msk [vmem:[%s3 + $0x70] sm:$0xff] %vm62, %v1705
  %1728 = vst.msk [vmem:[%s3 + $0x78] sm:$0xff] %vm62, %v1710
  // Predicated region
  $region14: #{cross_modal_forward.4} parent=0 // pred_check
    _
  $region15: #{cross_modal_forward.4} parent=0 // pred_check_branch
    %1730 = sbr.rel (0) target = $region17
  $region16: #{cross_modal_forward.4} parent=0 // pred_region
    _
  $region17: #{cross_modal_forward.4} parent=0 // pred_fallthru
    _
  // Predicated region
  $region18: #{cross_modal_forward.4} parent=0 // pred_check
    _
  $region19: #{cross_modal_forward.4} parent=0 // pred_check_branch
    %1732 = sbr.rel (0) target = $region21
  $region20: #{cross_modal_forward.4} parent=0 // pred_region
    _
  $region21: #{cross_modal_forward.4} parent=0 // pred_fallthru
    _

</llo_original>
